<compile_context>
chip_gen: v6e
topology: v6e:2x2x1
jax: 0.10.0
libtpu: 0.0.40
codegen_flags: <defaults>
</compile_context>

<pallas_src>
import jax
import jax.numpy as jnp
from jax import lax
from jax.experimental import pallas as pl
from jax.experimental.pallas import tpu as pltpu

IN_FEATURES = 4
HIDDEN = 128
NUM_ACTIONS = 2
OUT_PAD = 8            # narrow padded output width (was 128)
MAX_TILE_B = 2048      # cap on batch rows per grid step
SUB_B_MAX = 128        # rows per in-kernel sub-chunk (bounds vreg pressure)


def _round_up(x, m):
    return ((x + m - 1) // m) * m


def _pick_tiles(batch):
    """Trace-time (TILE_B, SUB_B) choice. batch is a static Python int."""
    if batch <= SUB_B_MAX:
        # Small-batch / latency path (e.g. B=1..8 action selection):
        # min f32 tile is 8 sublanes, so pad only to a multiple of 8.
        tile_b = max(8, _round_up(batch, 8))
        return tile_b, tile_b
    # Large-batch path: big tiles to amortize ~0.35us/step grid overhead, but
    # keep >= 2 grid steps so v7x's two TensorCores both get a share.
    tile_b = min(MAX_TILE_B, max(SUB_B_MAX, _round_up(pl.cdiv(batch, 2), SUB_B_MAX)))
    return tile_b, SUB_B_MAX


def _make_qnet_kernel(tile_b, sub_b):
    n_sub = tile_b // sub_b
    unroll = True if n_sub <= 4 else 4   # bounded unroll for long trip counts

    def qnet_kernel(x_ref, w1_ref, b1_ref, w2_ref, b2_ref, w3_ref, b3_ref, o_ref):
        # Weights/biases are tiny and grid-resident (constant index_map).
        w1 = w1_ref[...]          # (4, 128)        f32
        b1 = b1_ref[...]          # (1, 128)        f32
        w2 = w2_ref[...]          # (128, 128)      bf16
        b2 = b2_ref[...]          # (1, 128)        f32
        w3 = w3_ref[...]          # (128, OUT_PAD)  bf16 (cols >= NUM_ACTIONS are 0)
        b3 = b3_ref[...]          # (1, OUT_PAD)    f32  (cols >= NUM_ACTIONS are 0)

        def body(c, carry):
            r0 = pl.multiple_of(c * sub_b, sub_b)
            x = x_ref[pl.ds(r0, sub_b), :]                       # (sub_b, 4) f32
            # fc1: K=4 -> 4-term broadcast MAC on the VPU (skip a ~3%-utilized MXU pass).
            h1 = (x[:, 0:1] * w1[0:1, :] + x[:, 1:2] * w1[1:2, :]
                  + x[:, 2:3] * w1[2:3, :] + x[:, 3:4] * w1[3:4, :]) + b1
            h1 = jnp.maximum(h1, 0.0)
            # fc2 / fc3: bf16 operands on the MXU, f32 accumulation; bias/relu in f32.
            h2 = jnp.dot(h1.astype(w2.dtype), w2,
                         preferred_element_type=jnp.float32) + b2
            h2 = jnp.maximum(h2, 0.0)
            out = jnp.dot(h2.astype(w3.dtype), w3,
                          preferred_element_type=jnp.float32) + b3
            o_ref[pl.ds(r0, sub_b), :] = out.astype(o_ref.dtype)  # narrow (sub_b, 8) store
            return carry

        lax.fori_loop(0, n_sub, body, 0, unroll=unroll)

    return qnet_kernel


def qnet_forward(x, kernel_params):
    """x: (B, 4) float32 observations. Returns (B, NUM_ACTIONS) float32 Q-values."""
    w1, b1, w2, b2, w3p, b3p = kernel_params
    B = x.shape[0]
    tile_b, sub_b = _pick_tiles(B)
    n_tiles = pl.cdiv(B, tile_b)
    Bp = n_tiles * tile_b
    if Bp != B:
        x = jnp.pad(x, ((0, Bp - B), (0, 0)))

    out = pl.pallas_call(
        _make_qnet_kernel(tile_b, sub_b),
        out_shape=jax.ShapeDtypeStruct((Bp, OUT_PAD), jnp.float32),
        grid=(n_tiles,),
        in_specs=[
            pl.BlockSpec((tile_b, IN_FEATURES), lambda i: (i, 0)),   # x streams
            pl.BlockSpec((IN_FEATURES, HIDDEN), lambda i: (0, 0)),   # w1 resident
            pl.BlockSpec((1, HIDDEN), lambda i: (0, 0)),             # b1 resident
            pl.BlockSpec((HIDDEN, HIDDEN), lambda i: (0, 0)),        # w2 resident
            pl.BlockSpec((1, HIDDEN), lambda i: (0, 0)),             # b2 resident
            pl.BlockSpec((HIDDEN, OUT_PAD), lambda i: (0, 0)),       # w3 (narrow pad)
            pl.BlockSpec((1, OUT_PAD), lambda i: (0, 0)),            # b3 (narrow pad)
        ],
        out_specs=pl.BlockSpec((tile_b, OUT_PAD), lambda i: (i, 0)),
        compiler_params=pltpu.CompilerParams(
            dimension_semantics=("parallel",)),   # v7x: shard batch over both TCs
    )(x, w1, b1, w2, b2, w3p, b3p)
    # (Bp, 8) -> (B, 2): only 32 B/row, no longer a full-array HBM pass.
    return out[:B, :NUM_ACTIONS]


def init_params(key):
    """Deterministic PyTorch-style init. Weights kept (in, out), all float32."""
    def linear(k, fan_in, fan_out):
        kw, kb = jax.random.split(k)
        bound = 1.0 / jnp.sqrt(fan_in)
        w = jax.random.uniform(kw, (fan_in, fan_out), jnp.float32, -bound, bound)
        b = jax.random.uniform(kb, (1, fan_out), jnp.float32, -bound, bound)
        return w, b

    k1, k2, k3 = jax.random.split(key, 3)
    w1, b1 = linear(k1, IN_FEATURES, HIDDEN)
    w2, b2 = linear(k2, HIDDEN, HIDDEN)
    w3, b3 = linear(k3, HIDDEN, NUM_ACTIONS)
    return (w1, b1, w2, b2, w3, b3)


def pack_params(params_f32):
    """Kernel-side parameters: bf16 MXU weights, w3/b3 zero-padded to OUT_PAD cols."""
    w1, b1, w2, b2, w3, b3 = params_f32
    w3p = jnp.zeros((HIDDEN, OUT_PAD), jnp.float32).at[:, :NUM_ACTIONS].set(w3)
    b3p = jnp.zeros((1, OUT_PAD), jnp.float32).at[:, :NUM_ACTIONS].set(b3)
    return (w1, b1,
            w2.astype(jnp.bfloat16), b2,
            w3p.astype(jnp.bfloat16), b3p)


def qnet_reference_f32(x, params_f32):
    """Pure-f32 reference matching the PyTorch module semantics."""
    w1, b1, w2, b2, w3, b3 = params_f32
    h1 = jnp.maximum(x @ w1 + b1, 0.0)
    h2 = jnp.maximum(h1 @ w2 + b2, 0.0)
    return h2 @ w3 + b3


def qnet_reference_kernel_math(x, params_f32):
    """Reference mirroring the kernel numerics: f32 fc1 MAC, bf16-operand fc2/fc3."""
    w1, b1, w2, b2, w3, b3 = params_f32
    h1 = jnp.maximum(jnp.sum(x[:, :, None] * w1[None, :, :], axis=1) + b1, 0.0)
    h2 = jnp.maximum(
        jnp.dot(h1.astype(jnp.bfloat16), w2.astype(jnp.bfloat16),
                preferred_element_type=jnp.float32) + b2, 0.0)
    return jnp.dot(h2.astype(jnp.bfloat16), w3.astype(jnp.bfloat16),
                   preferred_element_type=jnp.float32) + b3


if __name__ == "__main__":
    key = jax.random.PRNGKey(0)
    kx, kp = jax.random.split(key)

    params_f32 = init_params(kp)
    kernel_params = pack_params(params_f32)

    # Batched inference (replay-buffer style minibatch): exercises the
    # multi-tile path (TILE_B=256, 2 grid steps -> both v7x TCs busy).
    B = 512
    x = jax.random.normal(kx, (B, IN_FEATURES), jnp.float32)
    out = jax.block_until_ready(qnet_forward(x, kernel_params))
    assert out.shape == (B, NUM_ACTIONS)
    assert jnp.allclose(out, qnet_reference_kernel_math(x, params_f32),
                        atol=1e-3, rtol=1e-3), "mismatch vs kernel-math reference"
    assert jnp.allclose(out, qnet_reference_f32(x, params_f32),
                        atol=5e-2, rtol=5e-2), "mismatch vs f32 reference"

    # Small ragged batch (CartPole-style, B=8): exercises the small-batch
    # latency path (TILE_B=8, single grid step, no 32x padding).
    x_small = jax.random.normal(jax.random.PRNGKey(1), (8, IN_FEATURES), jnp.float32)
    out_small = jax.block_until_ready(qnet_forward(x_small, kernel_params))
    assert out_small.shape == (8, NUM_ACTIONS)
    assert jnp.allclose(out_small, qnet_reference_kernel_math(x_small, params_f32),
                        atol=1e-3, rtol=1e-3), "mismatch on small batch"

    # Single-observation case (what sample_action would call).
    # TODO(synk): sample_action's epsilon-greedy coin flip is host-side python
    # control flow and intentionally not part of the kernel.
    x_one = jax.random.normal(jax.random.PRNGKey(2), (1, IN_FEATURES), jnp.float32)
    out_one = jax.block_until_ready(qnet_forward(x_one, kernel_params))
    assert out_one.shape == (1, NUM_ACTIONS)
    assert jnp.allclose(out_one, qnet_reference_kernel_math(x_one, params_f32),
                        atol=1e-3, rtol=1e-3), "mismatch on single observation"

    print("KERNEL_OK")
</pallas_src>

<mosaic_0001>
module attributes {stable_mosaic.version = 11 : i64} {
  func.func @qnet_kernel(%arg0: i32, %arg1: memref<256x4xf32, #tpu.memory_space<vmem>>, %arg2: memref<4x128xf32, #tpu.memory_space<vmem>>, %arg3: memref<1x128xf32, #tpu.memory_space<vmem>>, %arg4: memref<128x128xbf16, #tpu.memory_space<vmem>>, %arg5: memref<1x128xf32, #tpu.memory_space<vmem>>, %arg6: memref<128x8xbf16, #tpu.memory_space<vmem>>, %arg7: memref<1x8xf32, #tpu.memory_space<vmem>>, %arg8: memref<256x8xf32, #tpu.memory_space<vmem>>) attributes {dimension_semantics = [#tpu.dimension_semantics<parallel>], iteration_bounds = array<i64: 2>, scalar_prefetch = 0 : i64, scratch_operands = 0 : i64, tpu.core_type = #tpu.core_type<tc>, window_params = [{transform_indices = @transform_0, window_bounds = array<i64: 256, 4>}, {pipeline_mode = #tpu.pipeline_mode<synchronous>, transform_indices = @transform_1, window_bounds = array<i64: 4, 128>}, {pipeline_mode = #tpu.pipeline_mode<synchronous>, transform_indices = @transform_2, window_bounds = array<i64: 1, 128>}, {pipeline_mode = #tpu.pipeline_mode<synchronous>, transform_indices = @transform_3, window_bounds = array<i64: 128, 128>}, {pipeline_mode = #tpu.pipeline_mode<synchronous>, transform_indices = @transform_4, window_bounds = array<i64: 1, 128>}, {pipeline_mode = #tpu.pipeline_mode<synchronous>, transform_indices = @transform_5, window_bounds = array<i64: 128, 8>}, {pipeline_mode = #tpu.pipeline_mode<synchronous>, transform_indices = @transform_6, window_bounds = array<i64: 1, 8>}, {transform_indices = @transform_7, window_bounds = array<i64: 256, 8>}]} {
    %c0 = arith.constant 0 : index
    %c0_0 = arith.constant 0 : index
    %0 = vector.load %arg2[%c0, %c0_0] : memref<4x128xf32, #tpu.memory_space<vmem>>, vector<4x128xf32>
    %c0_1 = arith.constant 0 : index
    %c0_2 = arith.constant 0 : index
    %1 = vector.load %arg3[%c0_1, %c0_2] : memref<1x128xf32, #tpu.memory_space<vmem>>, vector<1x128xf32>
    %c0_3 = arith.constant 0 : index
    %c0_4 = arith.constant 0 : index
    %2 = vector.load %arg4[%c0_3, %c0_4] : memref<128x128xbf16, #tpu.memory_space<vmem>>, vector<128x128xbf16>
    %c0_5 = arith.constant 0 : index
    %c0_6 = arith.constant 0 : index
    %3 = vector.load %arg5[%c0_5, %c0_6] : memref<1x128xf32, #tpu.memory_space<vmem>>, vector<1x128xf32>
    %c0_7 = arith.constant 0 : index
    %c0_8 = arith.constant 0 : index
    %4 = vector.load %arg6[%c0_7, %c0_8] : memref<128x8xbf16, #tpu.memory_space<vmem>>, vector<128x8xbf16>
    %c0_9 = arith.constant 0 : index
    %c0_10 = arith.constant 0 : index
    %5 = vector.load %arg7[%c0_9, %c0_10] : memref<1x8xf32, #tpu.memory_space<vmem>>, vector<1x8xf32>
    %c0_i32 = arith.constant 0 : i32
    %c128_i32 = arith.constant 128 : i32
    %6 = arith.muli %c0_i32, %c128_i32 : i32
    %7 = tpu.assume_multiple %6, 128 : i32
    %8 = arith.index_cast %7 : i32 to index
    %c0_11 = arith.constant 0 : index
    %9 = vector.load %arg1[%8, %c0_11] : memref<256x4xf32, #tpu.memory_space<vmem>>, vector<128x4xf32>
    %10 = vector.extract_strided_slice %9 {offsets = [0, 0], sizes = [128, 1], strides = [1, 1]} : vector<128x4xf32> to vector<128x1xf32>
    %11 = vector.extract_strided_slice %0 {offsets = [0, 0], sizes = [1, 128], strides = [1, 1]} : vector<4x128xf32> to vector<1x128xf32>
    %12 = vector.broadcast %10 : vector<128x1xf32> to vector<128x128xf32>
    %13 = vector.broadcast %11 : vector<1x128xf32> to vector<128x128xf32>
    %14 = arith.mulf %12, %13 : vector<128x128xf32>
    %15 = vector.extract_strided_slice %9 {offsets = [0, 1], sizes = [128, 1], strides = [1, 1]} : vector<128x4xf32> to vector<128x1xf32>
    %16 = vector.extract_strided_slice %0 {offsets = [1, 0], sizes = [1, 128], strides = [1, 1]} : vector<4x128xf32> to vector<1x128xf32>
    %17 = vector.broadcast %15 : vector<128x1xf32> to vector<128x128xf32>
    %18 = vector.broadcast %16 : vector<1x128xf32> to vector<128x128xf32>
    %19 = arith.mulf %17, %18 : vector<128x128xf32>
    %20 = arith.addf %14, %19 : vector<128x128xf32>
    %21 = vector.extract_strided_slice %9 {offsets = [0, 2], sizes = [128, 1], strides = [1, 1]} : vector<128x4xf32> to vector<128x1xf32>
    %22 = vector.extract_strided_slice %0 {offsets = [2, 0], sizes = [1, 128], strides = [1, 1]} : vector<4x128xf32> to vector<1x128xf32>
    %23 = vector.broadcast %21 : vector<128x1xf32> to vector<128x128xf32>
    %24 = vector.broadcast %22 : vector<1x128xf32> to vector<128x128xf32>
    %25 = arith.mulf %23, %24 : vector<128x128xf32>
    %26 = arith.addf %20, %25 : vector<128x128xf32>
    %27 = vector.extract_strided_slice %9 {offsets = [0, 3], sizes = [128, 1], strides = [1, 1]} : vector<128x4xf32> to vector<128x1xf32>
    %28 = vector.extract_strided_slice %0 {offsets = [3, 0], sizes = [1, 128], strides = [1, 1]} : vector<4x128xf32> to vector<1x128xf32>
    %29 = vector.broadcast %27 : vector<128x1xf32> to vector<128x128xf32>
    %30 = vector.broadcast %28 : vector<1x128xf32> to vector<128x128xf32>
    %31 = arith.mulf %29, %30 : vector<128x128xf32>
    %32 = arith.addf %26, %31 : vector<128x128xf32>
    %33 = vector.broadcast %1 : vector<1x128xf32> to vector<128x128xf32>
    %34 = arith.addf %32, %33 : vector<128x128xf32>
    %cst = arith.constant 0.000000e+00 : f32
    %35 = vector.broadcast %cst : f32 to vector<128x128xf32>
    %36 = arith.maximumf %34, %35 : vector<128x128xf32>
    %37 = arith.truncf %36 : vector<128x128xf32> to vector<128x128xbf16>
    %cst_12 = arith.constant dense<0.000000e+00> : vector<128x128xf32>
    %38 = tpu.matmul %37, %2, %cst_12 {dimension_numbers = #tpu.dot_dimension_numbers<[1], [0], [0], [1], [0, 0, 1, 1], [], []>} : vector<128x128xbf16>, vector<128x128xbf16>, vector<128x128xf32> -> vector<128x128xf32>
    %39 = vector.broadcast %3 : vector<1x128xf32> to vector<128x128xf32>
    %40 = arith.addf %38, %39 : vector<128x128xf32>
    %cst_13 = arith.constant 0.000000e+00 : f32
    %41 = vector.broadcast %cst_13 : f32 to vector<128x128xf32>
    %42 = arith.maximumf %40, %41 : vector<128x128xf32>
    %43 = arith.truncf %42 : vector<128x128xf32> to vector<128x128xbf16>
    %cst_14 = arith.constant dense<0.000000e+00> : vector<128x8xf32>
    %44 = tpu.matmul %43, %4, %cst_14 {dimension_numbers = #tpu.dot_dimension_numbers<[1], [0], [0], [1], [0, 0, 1, 1], [], []>} : vector<128x128xbf16>, vector<128x8xbf16>, vector<128x8xf32> -> vector<128x8xf32>
    %45 = vector.broadcast %5 : vector<1x8xf32> to vector<128x8xf32>
    %46 = arith.addf %44, %45 : vector<128x8xf32>
    %47 = arith.index_cast %7 : i32 to index
    %c0_15 = arith.constant 0 : index
    %48 = vector.load %arg8[%47, %c0_15] : memref<256x8xf32, #tpu.memory_space<vmem>>, vector<128x8xf32>
    tpu.vector_store %arg8[%47, %c0_15], %46 {strides = array<i32>} : memref<256x8xf32, #tpu.memory_space<vmem>>, vector<128x8xf32>,
    %c1_i32 = arith.constant 1 : i32
    %c128_i32_16 = arith.constant 128 : i32
    %49 = arith.muli %c1_i32, %c128_i32_16 : i32
    %50 = tpu.assume_multiple %49, 128 : i32
    %51 = arith.index_cast %50 : i32 to index
    %c0_17 = arith.constant 0 : index
    %52 = vector.load %arg1[%51, %c0_17] : memref<256x4xf32, #tpu.memory_space<vmem>>, vector<128x4xf32>
    %53 = vector.extract_strided_slice %52 {offsets = [0, 0], sizes = [128, 1], strides = [1, 1]} : vector<128x4xf32> to vector<128x1xf32>
    %54 = vector.extract_strided_slice %0 {offsets = [0, 0], sizes = [1, 128], strides = [1, 1]} : vector<4x128xf32> to vector<1x128xf32>
    %55 = vector.broadcast %53 : vector<128x1xf32> to vector<128x128xf32>
    %56 = vector.broadcast %54 : vector<1x128xf32> to vector<128x128xf32>
    %57 = arith.mulf %55, %56 : vector<128x128xf32>
    %58 = vector.extract_strided_slice %52 {offsets = [0, 1], sizes = [128, 1], strides = [1, 1]} : vector<128x4xf32> to vector<128x1xf32>
    %59 = vector.extract_strided_slice %0 {offsets = [1, 0], sizes = [1, 128], strides = [1, 1]} : vector<4x128xf32> to vector<1x128xf32>
    %60 = vector.broadcast %58 : vector<128x1xf32> to vector<128x128xf32>
    %61 = vector.broadcast %59 : vector<1x128xf32> to vector<128x128xf32>
    %62 = arith.mulf %60, %61 : vector<128x128xf32>
    %63 = arith.addf %57, %62 : vector<128x128xf32>
    %64 = vector.extract_strided_slice %52 {offsets = [0, 2], sizes = [128, 1], strides = [1, 1]} : vector<128x4xf32> to vector<128x1xf32>
    %65 = vector.extract_strided_slice %0 {offsets = [2, 0], sizes = [1, 128], strides = [1, 1]} : vector<4x128xf32> to vector<1x128xf32>
    %66 = vector.broadcast %64 : vector<128x1xf32> to vector<128x128xf32>
    %67 = vector.broadcast %65 : vector<1x128xf32> to vector<128x128xf32>
    %68 = arith.mulf %66, %67 : vector<128x128xf32>
    %69 = arith.addf %63, %68 : vector<128x128xf32>
    %70 = vector.extract_strided_slice %52 {offsets = [0, 3], sizes = [128, 1], strides = [1, 1]} : vector<128x4xf32> to vector<128x1xf32>
    %71 = vector.extract_strided_slice %0 {offsets = [3, 0], sizes = [1, 128], strides = [1, 1]} : vector<4x128xf32> to vector<1x128xf32>
    %72 = vector.broadcast %70 : vector<128x1xf32> to vector<128x128xf32>
    %73 = vector.broadcast %71 : vector<1x128xf32> to vector<128x128xf32>
    %74 = arith.mulf %72, %73 : vector<128x128xf32>
    %75 = arith.addf %69, %74 : vector<128x128xf32>
    %76 = vector.broadcast %1 : vector<1x128xf32> to vector<128x128xf32>
    %77 = arith.addf %75, %76 : vector<128x128xf32>
    %cst_18 = arith.constant 0.000000e+00 : f32
    %78 = vector.broadcast %cst_18 : f32 to vector<128x128xf32>
    %79 = arith.maximumf %77, %78 : vector<128x128xf32>
    %80 = arith.truncf %79 : vector<128x128xf32> to vector<128x128xbf16>
    %cst_19 = arith.constant dense<0.000000e+00> : vector<128x128xf32>
    %81 = tpu.matmul %80, %2, %cst_19 {dimension_numbers = #tpu.dot_dimension_numbers<[1], [0], [0], [1], [0, 0, 1, 1], [], []>} : vector<128x128xbf16>, vector<128x128xbf16>, vector<128x128xf32> -> vector<128x128xf32>
    %82 = vector.broadcast %3 : vector<1x128xf32> to vector<128x128xf32>
    %83 = arith.addf %81, %82 : vector<128x128xf32>
    %cst_20 = arith.constant 0.000000e+00 : f32
    %84 = vector.broadcast %cst_20 : f32 to vector<128x128xf32>
    %85 = arith.maximumf %83, %84 : vector<128x128xf32>
    %86 = arith.truncf %85 : vector<128x128xf32> to vector<128x128xbf16>
    %cst_21 = arith.constant dense<0.000000e+00> : vector<128x8xf32>
    %87 = tpu.matmul %86, %4, %cst_21 {dimension_numbers = #tpu.dot_dimension_numbers<[1], [0], [0], [1], [0, 0, 1, 1], [], []>} : vector<128x128xbf16>, vector<128x8xbf16>, vector<128x8xf32> -> vector<128x8xf32>
    %88 = vector.broadcast %5 : vector<1x8xf32> to vector<128x8xf32>
    %89 = arith.addf %87, %88 : vector<128x8xf32>
    %90 = arith.index_cast %50 : i32 to index
    %c0_22 = arith.constant 0 : index
    %91 = vector.load %arg8[%90, %c0_22] : memref<256x8xf32, #tpu.memory_space<vmem>>, vector<128x8xf32>
    tpu.vector_store %arg8[%90, %c0_22], %89 {strides = array<i32>} : memref<256x8xf32, #tpu.memory_space<vmem>>, vector<128x8xf32>,
    %c2_i32 = arith.constant 2 : i32
    return
  }
  func.func @transform_0(%arg0: i32) -> (i32, i32) {
    %c0_i32 = arith.constant 0 : i32
    %c0_i32_0 = arith.constant 0 : i32
    return %arg0, %c0_i32 : i32, i32
  }
  func.func @transform_1(%arg0: i32) -> (i32, i32) {
    %c0_i32 = arith.constant 0 : i32
    %c0_i32_0 = arith.constant 0 : i32
    %c0_i32_1 = arith.constant 0 : i32
    return %c0_i32, %c0_i32_0 : i32, i32
  }
  func.func @transform_2(%arg0: i32) -> (i32, i32) {
    %c0_i32 = arith.constant 0 : i32
    %c0_i32_0 = arith.constant 0 : i32
    %c0_i32_1 = arith.constant 0 : i32
    return %c0_i32, %c0_i32_0 : i32, i32
  }
  func.func @transform_3(%arg0: i32) -> (i32, i32) {
    %c0_i32 = arith.constant 0 : i32
    %c0_i32_0 = arith.constant 0 : i32
    %c0_i32_1 = arith.constant 0 : i32
    return %c0_i32, %c0_i32_0 : i32, i32
  }
  func.func @transform_4(%arg0: i32) -> (i32, i32) {
    %c0_i32 = arith.constant 0 : i32
    %c0_i32_0 = arith.constant 0 : i32
    %c0_i32_1 = arith.constant 0 : i32
    return %c0_i32, %c0_i32_0 : i32, i32
  }
  func.func @transform_5(%arg0: i32) -> (i32, i32) {
    %c0_i32 = arith.constant 0 : i32
    %c0_i32_0 = arith.constant 0 : i32
    %c0_i32_1 = arith.constant 0 : i32
    return %c0_i32, %c0_i32_0 : i32, i32
  }
  func.func @transform_6(%arg0: i32) -> (i32, i32) {
    %c0_i32 = arith.constant 0 : i32
    %c0_i32_0 = arith.constant 0 : i32
    %c0_i32_1 = arith.constant 0 : i32
    return %c0_i32, %c0_i32_0 : i32, i32
  }
  func.func @transform_7(%arg0: i32) -> (i32, i32) {
    %c0_i32 = arith.constant 0 : i32
    %c0_i32_0 = arith.constant 0 : i32
    return %arg0, %c0_i32 : i32, i32
  }
}

</mosaic_0001>

<llo_original>
// kernel: tpu_custom_call.1
$region0: #{tpu_custom_call.1}
  #allocation0 [shape = 'u32[]', space=smem, size = 0x4, offset = 0x4, fixed_abs, tag = 'smem constant byte address 0x4 - core index']
  #allocation1 [shape = 'u32[144,128]{1,0:T(1,128)}', space=vmem, size = 0x12000, scoped, tag = 'internal scratch']
  %s0 = inlined_call_operand.vmem [shape: f32[512,4], index: 0, kind: input, shape index: {}]
  %s1 = inlined_call_operand.vmem [shape: f32[4,128], index: 1, kind: input, shape index: {}]
  %s2 = inlined_call_operand.vmem [shape: f32[1,128], index: 2, kind: input, shape index: {}]
  %s3 = inlined_call_operand.vmem [shape: bf16[128,128], index: 3, kind: input, shape index: {}]
  %s4 = inlined_call_operand.vmem [shape: f32[1,128], index: 4, kind: input, shape index: {}]
  %s5 = inlined_call_operand.vmem [shape: bf16[128,8], index: 5, kind: input, shape index: {}]
  %s6 = inlined_call_operand.vmem [shape: f32[1,8], index: 6, kind: input, shape index: {}]
  %s7 = inlined_call_operand.vmem [shape: f32[512,8], index: 7, kind: output, shape index: {}]
  %s8 = sld [smem:[#allocation0]]
  $region61: #{tpu_custom_call.1} parent=0
    _
  %s10 = ssub.s32 1, %s8
  %s11 = scalar_select 0, %s10, %s8
  loop: start=0, step=1, limit=4
  $region2: #{tpu_custom_call.1} parent=0 // loop_pre_header
    _
  $region3: #{tpu_custom_call.1} parent=0 // loop_header
    %s13 = sphi 0, %s17
    %p14 = scmp.ge.s32.totalorder %s13, 4
    %s23 = sphi 0, %s25
    %s26 = sphi 0, %s23
    %s27 = sphi 0, %s26
    %s43 = sphi 0, %s27
    %s47 = sphi 0, %s47
    %s49 = sphi 0, %s47
    %s50 = sphi 0, %s49
    %s64 = sphi 0, %s50
    %s68 = sphi 0, %s68
    %s70 = sphi 0, %s68
    %s71 = sphi 0, %s70
    %s85 = sphi 0, %s71
    %s89 = sphi 0, %s89
    %s91 = sphi 0, %s89
    %s92 = sphi 0, %s91
    %s106 = sphi 0, %s92
    %s110 = sphi 0, %s110
    %s112 = sphi 0, %s110
    %s113 = sphi 0, %s112
    %s127 = sphi 0, %s113
    %s131 = sphi 0, %s131
    %s133 = sphi 0, %s131
    %s134 = sphi 0, %s133
    %s148 = sphi 0, %s134
    %s152 = sphi 0, %s152
    %s154 = sphi 0, %s152
    %s155 = sphi 0, %s154
    %s169 = sphi 0, %s155
    %s175 = sphi 0, %s177
    %s178 = sphi 0, %s175
    %s179 = sphi 0, %s178
    %s195 = sphi 0, %s179
  $region4: #{tpu_custom_call.1} parent=0 // loop_header_branch
    %16 = sbr.rel (%p14) target = $region8
  $region5: #{tpu_custom_call.1} parent=0 // loop_body
    %s18 = ssub.s32 %s13, 1
    %s19 = ssub.s32 %s13, 2
    %s20 = sadd.s32 %s13, 1
    %s21 = ssub.s32 %s13, %s20
    %p22 = scmp.eq.s32.totalorder %s21, 0
    %s24 = sadd.s32 %s23, 1
    %s25 = scalar_select %p22, %s23, %s24
    %p28 = pneg %p22
    %p29 = scmp.eq.s32.totalorder %s13, 1
    %p30 = por %p28, %p29
    %p31 = scmp.ne.s32.totalorder %s23, %s26
    %p32 = scmp.eq.s32.totalorder %s13, 0
    %p33 = por %p31, %p32
    %p34 = scmp.ne.s32.totalorder %s23, %s26
    %p35 = scmp.eq.s32.totalorder %s18, 1
    %p36 = por %p34, %p35
    %p37 = scmp.ne.s32.totalorder %s26, %s27
    %p38 = scmp.eq.s32.totalorder %s18, 0
    %p39 = por %p37, %p38
    %p40 = scmp.ne.s32.totalorder %s26, %s27
    %p41 = scmp.eq.s32.totalorder %s19, 1
    %p42 = por %p40, %p41
    %p44 = scmp.ne.s32.totalorder %s27, %s43
    %p45 = scmp.eq.s32.totalorder %s19, 0
    %p46 = por %p44, %p45
    %s48 = sadd.s32 %s47, 1
    %p51 = scmp.eq.s32.totalorder %s13, 1
    %p52 = scmp.ne.s32.totalorder %s47, %s49
    %p53 = scmp.eq.s32.totalorder %s13, 0
    %p54 = por %p52, %p53
    %p55 = scmp.ne.s32.totalorder %s47, %s49
    %p56 = scmp.eq.s32.totalorder %s18, 1
    %p57 = por %p55, %p56
    %p58 = scmp.ne.s32.totalorder %s49, %s50
    %p59 = scmp.eq.s32.totalorder %s18, 0
    %p60 = por %p58, %p59
    %p61 = scmp.ne.s32.totalorder %s49, %s50
    %p62 = scmp.eq.s32.totalorder %s19, 1
    %p63 = por %p61, %p62
    %p65 = scmp.ne.s32.totalorder %s50, %s64
    %p66 = scmp.eq.s32.totalorder %s19, 0
    %p67 = por %p65, %p66
    %s69 = sadd.s32 %s68, 1
    %p72 = scmp.eq.s32.totalorder %s13, 1
    %p73 = scmp.ne.s32.totalorder %s68, %s70
    %p74 = scmp.eq.s32.totalorder %s13, 0
    %p75 = por %p73, %p74
    %p76 = scmp.ne.s32.totalorder %s68, %s70
    %p77 = scmp.eq.s32.totalorder %s18, 1
    %p78 = por %p76, %p77
    %p79 = scmp.ne.s32.totalorder %s70, %s71
    %p80 = scmp.eq.s32.totalorder %s18, 0
    %p81 = por %p79, %p80
    %p82 = scmp.ne.s32.totalorder %s70, %s71
    %p83 = scmp.eq.s32.totalorder %s19, 1
    %p84 = por %p82, %p83
    %p86 = scmp.ne.s32.totalorder %s71, %s85
    %p87 = scmp.eq.s32.totalorder %s19, 0
    %p88 = por %p86, %p87
    %s90 = sadd.s32 %s89, 1
    %p93 = scmp.eq.s32.totalorder %s13, 1
    %p94 = scmp.ne.s32.totalorder %s89, %s91
    %p95 = scmp.eq.s32.totalorder %s13, 0
    %p96 = por %p94, %p95
    %p97 = scmp.ne.s32.totalorder %s89, %s91
    %p98 = scmp.eq.s32.totalorder %s18, 1
    %p99 = por %p97, %p98
    %p100 = scmp.ne.s32.totalorder %s91, %s92
    %p101 = scmp.eq.s32.totalorder %s18, 0
    %p102 = por %p100, %p101
    %p103 = scmp.ne.s32.totalorder %s91, %s92
    %p104 = scmp.eq.s32.totalorder %s19, 1
    %p105 = por %p103, %p104
    %p107 = scmp.ne.s32.totalorder %s92, %s106
    %p108 = scmp.eq.s32.totalorder %s19, 0
    %p109 = por %p107, %p108
    %s111 = sadd.s32 %s110, 1
    %p114 = scmp.eq.s32.totalorder %s13, 1
    %p115 = scmp.ne.s32.totalorder %s110, %s112
    %p116 = scmp.eq.s32.totalorder %s13, 0
    %p117 = por %p115, %p116
    %p118 = scmp.ne.s32.totalorder %s110, %s112
    %p119 = scmp.eq.s32.totalorder %s18, 1
    %p120 = por %p118, %p119
    %p121 = scmp.ne.s32.totalorder %s112, %s113
    %p122 = scmp.eq.s32.totalorder %s18, 0
    %p123 = por %p121, %p122
    %p124 = scmp.ne.s32.totalorder %s112, %s113
    %p125 = scmp.eq.s32.totalorder %s19, 1
    %p126 = por %p124, %p125
    %p128 = scmp.ne.s32.totalorder %s113, %s127
    %p129 = scmp.eq.s32.totalorder %s19, 0
    %p130 = por %p128, %p129
    %s132 = sadd.s32 %s131, 1
    %p135 = scmp.eq.s32.totalorder %s13, 1
    %p136 = scmp.ne.s32.totalorder %s131, %s133
    %p137 = scmp.eq.s32.totalorder %s13, 0
    %p138 = por %p136, %p137
    %p139 = scmp.ne.s32.totalorder %s131, %s133
    %p140 = scmp.eq.s32.totalorder %s18, 1
    %p141 = por %p139, %p140
    %p142 = scmp.ne.s32.totalorder %s133, %s134
    %p143 = scmp.eq.s32.totalorder %s18, 0
    %p144 = por %p142, %p143
    %p145 = scmp.ne.s32.totalorder %s133, %s134
    %p146 = scmp.eq.s32.totalorder %s19, 1
    %p147 = por %p145, %p146
    %p149 = scmp.ne.s32.totalorder %s134, %s148
    %p150 = scmp.eq.s32.totalorder %s19, 0
    %p151 = por %p149, %p150
    %s153 = sadd.s32 %s152, 1
    %p156 = scmp.eq.s32.totalorder %s13, 1
    %p157 = scmp.ne.s32.totalorder %s152, %s154
    %p158 = scmp.eq.s32.totalorder %s13, 0
    %p159 = por %p157, %p158
    %p160 = scmp.ne.s32.totalorder %s152, %s154
    %p161 = scmp.eq.s32.totalorder %s18, 1
    %p162 = por %p160, %p161
    %p163 = scmp.ne.s32.totalorder %s154, %s155
    %p164 = scmp.eq.s32.totalorder %s18, 0
    %p165 = por %p163, %p164
    %p166 = scmp.ne.s32.totalorder %s154, %s155
    %p167 = scmp.eq.s32.totalorder %s19, 1
    %p168 = por %p166, %p167
    %p170 = scmp.ne.s32.totalorder %s155, %s169
    %p171 = scmp.eq.s32.totalorder %s19, 0
    %p172 = por %p170, %p171
    %s173 = ssub.s32 %s13, %s20
    %p174 = scmp.eq.s32.totalorder %s173, 0
    %s176 = sadd.s32 %s175, 1
    %s177 = scalar_select %p174, %s175, %s176
    %p180 = pneg %p174
    %p181 = scmp.eq.s32.totalorder %s13, 1
    %p182 = por %p180, %p181
    %p183 = scmp.ne.s32.totalorder %s175, %s178
    %p184 = scmp.eq.s32.totalorder %s13, 0
    %p185 = por %p183, %p184
    %p186 = scmp.ne.s32.totalorder %s175, %s178
    %p187 = scmp.eq.s32.totalorder %s18, 1
    %p188 = por %p186, %p187
    %p189 = scmp.ne.s32.totalorder %s178, %s179
    %p190 = scmp.eq.s32.totalorder %s18, 0
    %p191 = por %p189, %p190
    %p192 = scmp.ne.s32.totalorder %s178, %s179
    %p193 = scmp.eq.s32.totalorder %s19, 1
    %p194 = por %p192, %p193
    %p196 = scmp.ne.s32.totalorder %s179, %s195
    %p197 = scmp.eq.s32.totalorder %s19, 0
    %p198 = por %p196, %p197
    %p199 = scmp.le.s32.totalorder 1, %s13
    %p200 = scmp.lt.s32.totalorder %s13, 3
    %p201 = pnand %p199, %p200
    %p202 = pneg %p201
    // Predicated region
    $region9: #{tpu_custom_call.1} parent=5 // pred_check
      _
    $region10: #{tpu_custom_call.1} parent=5 // pred_check_branch
      %204 = sbr.rel (%p201) target = $region12
    $region11: #{tpu_custom_call.1} parent=5 // pred_region
      %s205 = ssub.s32 %s13, 1
      // Predicated region
      $region13: #{tpu_custom_call.1} parent=11 // pred_check
        %p206 = pneg %p60
      $region14: #{tpu_custom_call.1} parent=11 // pred_check_branch
        %208 = sbr.rel (%p206) target = $region16
      $region15: #{tpu_custom_call.1} parent=11 // pred_region
        _
      $region16: #{tpu_custom_call.1} parent=11 // pred_fallthru
        _
      // Predicated region
      $region17: #{tpu_custom_call.1} parent=11 // pred_check
        %p209 = pneg %p81
      $region18: #{tpu_custom_call.1} parent=11 // pred_check_branch
        %211 = sbr.rel (%p209) target = $region20
      $region19: #{tpu_custom_call.1} parent=11 // pred_region
        _
      $region20: #{tpu_custom_call.1} parent=11 // pred_fallthru
        _
      // Predicated region
      $region21: #{tpu_custom_call.1} parent=11 // pred_check
        %p212 = pneg %p102
      $region22: #{tpu_custom_call.1} parent=11 // pred_check_branch
        %214 = sbr.rel (%p212) target = $region24
      $region23: #{tpu_custom_call.1} parent=11 // pred_region
        _
      $region24: #{tpu_custom_call.1} parent=11 // pred_fallthru
        _
      // Predicated region
      $region25: #{tpu_custom_call.1} parent=11 // pred_check
        %p215 = pneg %p123
      $region26: #{tpu_custom_call.1} parent=11 // pred_check_branch
        %217 = sbr.rel (%p215) target = $region28
      $region27: #{tpu_custom_call.1} parent=11 // pred_region
        _
      $region28: #{tpu_custom_call.1} parent=11 // pred_fallthru
        _
      // Predicated region
      $region29: #{tpu_custom_call.1} parent=11 // pred_check
        %p218 = pneg %p144
      $region30: #{tpu_custom_call.1} parent=11 // pred_check_branch
        %220 = sbr.rel (%p218) target = $region32
      $region31: #{tpu_custom_call.1} parent=11 // pred_region
        _
      $region32: #{tpu_custom_call.1} parent=11 // pred_fallthru
        _
      // Predicated region
      $region33: #{tpu_custom_call.1} parent=11 // pred_check
        %p221 = pneg %p165
      $region34: #{tpu_custom_call.1} parent=11 // pred_check_branch
        %223 = sbr.rel (%p221) target = $region36
      $region35: #{tpu_custom_call.1} parent=11 // pred_region
        _
      $region36: #{tpu_custom_call.1} parent=11 // pred_fallthru
        _
    $region12: #{tpu_custom_call.1} parent=5 // pred_fallthru
      _
    %p224 = scmp.lt.s32.totalorder %s13, 2
    // Predicated region
    $region37: #{tpu_custom_call.1} parent=5 // pred_check
      %p225 = pneg %p224
    $region38: #{tpu_custom_call.1} parent=5 // pred_check_branch
      %227 = sbr.rel (%p225) target = $region40
    $region39: #{tpu_custom_call.1} parent=5 // pred_region
      // Predicated region
      $region41: #{tpu_custom_call.1} parent=39 // pred_check
        %p228 = pneg %p33
      $region42: #{tpu_custom_call.1} parent=39 // pred_check_branch
        %230 = sbr.rel (%p228) target = $region44
      $region43: #{tpu_custom_call.1} parent=39 // pred_region
        %s231 = smul.u32 32, %s13
        %p232 = scmp.lt.s32.totalorder %s231, 63
        %s233 = scalar_select %p232, %s231, 63
        %s234 = smul.addr %s233, 8
        %s235 = scalar_lea.vmem %s0, %s234
        %s236 = smul.u32 32, %s13
      $region44: #{tpu_custom_call.1} parent=39 // pred_fallthru
        _
    $region40: #{tpu_custom_call.1} parent=5 // pred_fallthru
      _
    %p237 = scmp.le.s32.totalorder 1, %s13
    %p238 = scmp.lt.s32.totalorder %s13, 3
    %p239 = pnand %p237, %p238
    %p240 = pneg %p239
    // Predicated region
    $region45: #{tpu_custom_call.1} parent=5 // pred_check
      _
    $region46: #{tpu_custom_call.1} parent=5 // pred_check_branch
      %242 = sbr.rel (%p239) target = $region48
    $region47: #{tpu_custom_call.1} parent=5 // pred_region
      %s243 = ssub.s32 %s13, 1
      %s244 = smul.u32 32, %s18
      %p245 = scmp.lt.s32.totalorder %s244, 63
      %s246 = scalar_select %p245, %s244, 63
      %s247 = smul.addr %s246, 8
      %s248 = scalar_lea.vmem %s0, %s247
      %p249 = pneg %p39
      %p250 = pneg %p36
      %p251 = pneg %p60
      %p252 = pneg %p57
      %p253 = pneg %p81
      %p254 = pneg %p78
      %p255 = pneg %p102
      %p256 = pneg %p99
      %p257 = pneg %p123
      %p258 = pneg %p120
      %p259 = pneg %p144
      %p260 = pneg %p141
      %p261 = pneg %p165
      %p262 = pneg %p162
      %p263 = pneg %p191
      %p264 = pneg %p188
      %s265 = smul.u32 32, %s18
      %p266 = scmp.lt.s32.totalorder %s265, 63
      %s267 = scalar_select %p266, %s265, 63
      %s268 = smul.addr %s267, 8
      %s269 = scalar_lea.vmem %s7, %s268
      %s270 = smul.u32 32, %s18
      %p271 = scmp.lt.s32.totalorder %s270, 63
      %s272 = scalar_select %p271, %s270, 63
      %s273 = smul.addr %s272, 8
      %s274 = scalar_lea.vmem %s0, %s273
      %s275 = smul.u32 32, %s18
      %s276 = smul.u32 32, %s18
      %p277 = scmp.lt.s32.totalorder %s276, 63
      %s278 = scalar_select %p277, %s276, 63
      %s279 = smul.addr %s278, 8
      %s280 = scalar_lea.vmem %s7, %s279
      %s281 = smul.u32 32, %s18
      %v283 = vld [vmem:[%s1] sm:$0xf]
      %v284 = vld [vmem:[%s2] sm:$0x1]
      %v285 = vld [vmem:[%s3] sm:$0xf]
      %v286 = vld [vmem:[%s3 + $0x4] sm:$0xf]
      %v287 = vld [vmem:[%s3 + $0x8] sm:$0xf]
      %v288 = vld [vmem:[%s3 + $0xc] sm:$0xf]
      %v289 = vld [vmem:[%s3 + $0x10] sm:$0xf]
      %v290 = vld [vmem:[%s3 + $0x14] sm:$0xf]
      %v291 = vld [vmem:[%s3 + $0x18] sm:$0xf]
      %v292 = vld [vmem:[%s3 + $0x1c] sm:$0xf]
      %v293 = vld [vmem:[%s3 + $0x20] sm:$0xf]
      %v294 = vld [vmem:[%s3 + $0x24] sm:$0xf]
      %v295 = vld [vmem:[%s3 + $0x28] sm:$0xf]
      %v296 = vld [vmem:[%s3 + $0x2c] sm:$0xf]
      %v297 = vld [vmem:[%s3 + $0x30] sm:$0xf]
      %v298 = vld [vmem:[%s3 + $0x34] sm:$0xf]
      %v299 = vld [vmem:[%s3 + $0x38] sm:$0xf]
      %v300 = vld [vmem:[%s3 + $0x3c] sm:$0xf]
      %v301 = vld [vmem:[%s4] sm:$0x1]
      %v302 = vld [vmem:[%s5] sm:$0xf]
      %v303 = vld [vmem:[%s5 + $0x4] sm:$0xf]
      %v304 = vld [vmem:[%s5 + $0x8] sm:$0xf]
      %v305 = vld [vmem:[%s5 + $0xc] sm:$0xf]
      %v306 = vld [vmem:[%s5 + $0x10] sm:$0xf]
      %v307 = vld [vmem:[%s5 + $0x14] sm:$0xf]
      %v308 = vld [vmem:[%s5 + $0x18] sm:$0xf]
      %v309 = vld [vmem:[%s5 + $0x1c] sm:$0xf]
      %v310 = vld [vmem:[%s5 + $0x20] sm:$0xf]
      %v311 = vld [vmem:[%s5 + $0x24] sm:$0xf]
      %v312 = vld [vmem:[%s5 + $0x28] sm:$0xf]
      %v313 = vld [vmem:[%s5 + $0x2c] sm:$0xf]
      %v314 = vld [vmem:[%s5 + $0x30] sm:$0xf]
      %v315 = vld [vmem:[%s5 + $0x34] sm:$0xf]
      %v316 = vld [vmem:[%s5 + $0x38] sm:$0xf]
      %v317 = vld [vmem:[%s5 + $0x3c] sm:$0xf]
      %v318 = vld [vmem:[%s6] sm:$0x1]
      %v319 = vld [vmem:[%s274] sm:$0xff]
      %v320 = vld [vmem:[%s274 + $0x8] sm:$0xff]
      %v321 = vld [vmem:[%s274 + $0x10] sm:$0xff]
      %v322 = vld [vmem:[%s274 + $0x18] sm:$0xff]
      %v323 = vld [vmem:[%s274 + $0x20] sm:$0xff]
      %v324 = vld [vmem:[%s274 + $0x28] sm:$0xff]
      %v325 = vld [vmem:[%s274 + $0x30] sm:$0xff]
      %v326 = vld [vmem:[%s274 + $0x38] sm:$0xff]
      %v327 = vld [vmem:[%s274 + $0x40] sm:$0xff]
      %v328 = vld [vmem:[%s274 + $0x48] sm:$0xff]
      %v329 = vld [vmem:[%s274 + $0x50] sm:$0xff]
      %v330 = vld [vmem:[%s274 + $0x58] sm:$0xff]
      %v331 = vld [vmem:[%s274 + $0x60] sm:$0xff]
      %v332 = vld [vmem:[%s274 + $0x68] sm:$0xff]
      %v333 = vld [vmem:[%s274 + $0x70] sm:$0xff]
      %v334 = vld [vmem:[%s274 + $0x78] sm:$0xff]
      %336 = vset.pattern.permute.xlu0 0
      %337 = vperm.xlu0 %336, %v319
      %v338 = vpop.permute.xlu0 %337
      %341 = vset.pattern.permute.xlu0 0
      %342 = vperm.xlu0 %341, %v320
      %v343 = vpop.permute.xlu0 %342
      %346 = vset.pattern.permute.xlu0 0
      %347 = vperm.xlu0 %346, %v321
      %v348 = vpop.permute.xlu0 %347
      %351 = vset.pattern.permute.xlu0 0
      %352 = vperm.xlu0 %351, %v322
      %v353 = vpop.permute.xlu0 %352
      %356 = vset.pattern.permute.xlu0 0
      %357 = vperm.xlu0 %356, %v323
      %v358 = vpop.permute.xlu0 %357
      %361 = vset.pattern.permute.xlu0 0
      %362 = vperm.xlu0 %361, %v324
      %v363 = vpop.permute.xlu0 %362
      %366 = vset.pattern.permute.xlu0 0
      %367 = vperm.xlu0 %366, %v325
      %v368 = vpop.permute.xlu0 %367
      %371 = vset.pattern.permute.xlu0 0
      %372 = vperm.xlu0 %371, %v326
      %v373 = vpop.permute.xlu0 %372
      %376 = vset.pattern.permute.xlu0 0
      %377 = vperm.xlu0 %376, %v327
      %v378 = vpop.permute.xlu0 %377
      %381 = vset.pattern.permute.xlu0 0
      %382 = vperm.xlu0 %381, %v328
      %v383 = vpop.permute.xlu0 %382
      %386 = vset.pattern.permute.xlu0 0
      %387 = vperm.xlu0 %386, %v329
      %v388 = vpop.permute.xlu0 %387
      %391 = vset.pattern.permute.xlu0 0
      %392 = vperm.xlu0 %391, %v330
      %v393 = vpop.permute.xlu0 %392
      %396 = vset.pattern.permute.xlu0 0
      %397 = vperm.xlu0 %396, %v331
      %v398 = vpop.permute.xlu0 %397
      %401 = vset.pattern.permute.xlu0 0
      %402 = vperm.xlu0 %401, %v332
      %v403 = vpop.permute.xlu0 %402
      %406 = vset.pattern.permute.xlu0 0
      %407 = vperm.xlu0 %406, %v333
      %v408 = vpop.permute.xlu0 %407
      %411 = vset.pattern.permute.xlu0 0
      %412 = vperm.xlu0 %411, %v334
      %v413 = vpop.permute.xlu0 %412
      %v415 = vlaneseq
      %v416 = vshrl.u32 %v415, 7
      %v417 = vsub.s32 0, %v416
      %v418 = vrot.slane %v283, %v417
      %v419 = vmul.f32 %v338, %v418
      %v420 = vmul.f32 %v343, %v418
      %v421 = vmul.f32 %v348, %v418
      %v422 = vmul.f32 %v353, %v418
      %v423 = vmul.f32 %v358, %v418
      %v424 = vmul.f32 %v363, %v418
      %v425 = vmul.f32 %v368, %v418
      %v426 = vmul.f32 %v373, %v418
      %v427 = vmul.f32 %v378, %v418
      %v428 = vmul.f32 %v383, %v418
      %v429 = vmul.f32 %v388, %v418
      %v430 = vmul.f32 %v393, %v418
      %v431 = vmul.f32 %v398, %v418
      %v432 = vmul.f32 %v403, %v418
      %v433 = vmul.f32 %v408, %v418
      %v434 = vmul.f32 %v413, %v418
      %435 = vset.pattern.permute.xlu0 1
      %436 = vperm.xlu0 %435, %v319
      %v437 = vpop.permute.xlu0 %436
      %439 = vset.pattern.permute.xlu0 1
      %440 = vperm.xlu0 %439, %v320
      %v441 = vpop.permute.xlu0 %440
      %443 = vset.pattern.permute.xlu0 1
      %444 = vperm.xlu0 %443, %v321
      %v445 = vpop.permute.xlu0 %444
      %447 = vset.pattern.permute.xlu0 1
      %448 = vperm.xlu0 %447, %v322
      %v449 = vpop.permute.xlu0 %448
      %451 = vset.pattern.permute.xlu0 1
      %452 = vperm.xlu0 %451, %v323
      %v453 = vpop.permute.xlu0 %452
      %455 = vset.pattern.permute.xlu0 1
      %456 = vperm.xlu0 %455, %v324
      %v457 = vpop.permute.xlu0 %456
      %459 = vset.pattern.permute.xlu0 1
      %460 = vperm.xlu0 %459, %v325
      %v461 = vpop.permute.xlu0 %460
      %463 = vset.pattern.permute.xlu0 1
      %464 = vperm.xlu0 %463, %v326
      %v465 = vpop.permute.xlu0 %464
      %467 = vset.pattern.permute.xlu0 1
      %468 = vperm.xlu0 %467, %v327
      %v469 = vpop.permute.xlu0 %468
      %471 = vset.pattern.permute.xlu0 1
      %472 = vperm.xlu0 %471, %v328
      %v473 = vpop.permute.xlu0 %472
      %475 = vset.pattern.permute.xlu0 1
      %476 = vperm.xlu0 %475, %v329
      %v477 = vpop.permute.xlu0 %476
      %479 = vset.pattern.permute.xlu0 1
      %480 = vperm.xlu0 %479, %v330
      %v481 = vpop.permute.xlu0 %480
      %483 = vset.pattern.permute.xlu0 1
      %484 = vperm.xlu0 %483, %v331
      %v485 = vpop.permute.xlu0 %484
      %487 = vset.pattern.permute.xlu0 1
      %488 = vperm.xlu0 %487, %v332
      %v489 = vpop.permute.xlu0 %488
      %491 = vset.pattern.permute.xlu0 1
      %492 = vperm.xlu0 %491, %v333
      %v493 = vpop.permute.xlu0 %492
      %495 = vset.pattern.permute.xlu0 1
      %496 = vperm.xlu0 %495, %v334
      %v497 = vpop.permute.xlu0 %496
      %v499 = vlaneseq
      %v500 = vshrl.u32 %v499, 7
      %v501 = vsub.s32 1, %v500
      %v502 = vrot.slane %v283, %v501
      %v503 = vmul.f32 %v437, %v502
      %v504 = vmul.f32 %v441, %v502
      %v505 = vmul.f32 %v445, %v502
      %v506 = vmul.f32 %v449, %v502
      %v507 = vmul.f32 %v453, %v502
      %v508 = vmul.f32 %v457, %v502
      %v509 = vmul.f32 %v461, %v502
      %v510 = vmul.f32 %v465, %v502
      %v511 = vmul.f32 %v469, %v502
      %v512 = vmul.f32 %v473, %v502
      %v513 = vmul.f32 %v477, %v502
      %v514 = vmul.f32 %v481, %v502
      %v515 = vmul.f32 %v485, %v502
      %v516 = vmul.f32 %v489, %v502
      %v517 = vmul.f32 %v493, %v502
      %v518 = vmul.f32 %v497, %v502
      %v519 = vadd.f32 %v419, %v503
      %v520 = vadd.f32 %v420, %v504
      %v521 = vadd.f32 %v421, %v505
      %v522 = vadd.f32 %v422, %v506
      %v523 = vadd.f32 %v423, %v507
      %v524 = vadd.f32 %v424, %v508
      %v525 = vadd.f32 %v425, %v509
      %v526 = vadd.f32 %v426, %v510
      %v527 = vadd.f32 %v427, %v511
      %v528 = vadd.f32 %v428, %v512
      %v529 = vadd.f32 %v429, %v513
      %v530 = vadd.f32 %v430, %v514
      %v531 = vadd.f32 %v431, %v515
      %v532 = vadd.f32 %v432, %v516
      %v533 = vadd.f32 %v433, %v517
      %v534 = vadd.f32 %v434, %v518
      %535 = vset.pattern.permute.xlu0 2
      %536 = vperm.xlu0 %535, %v319
      %v537 = vpop.permute.xlu0 %536
      %539 = vset.pattern.permute.xlu0 2
      %540 = vperm.xlu0 %539, %v320
      %v541 = vpop.permute.xlu0 %540
      %543 = vset.pattern.permute.xlu0 2
      %544 = vperm.xlu0 %543, %v321
      %v545 = vpop.permute.xlu0 %544
      %547 = vset.pattern.permute.xlu0 2
      %548 = vperm.xlu0 %547, %v322
      %v549 = vpop.permute.xlu0 %548
      %551 = vset.pattern.permute.xlu0 2
      %552 = vperm.xlu0 %551, %v323
      %v553 = vpop.permute.xlu0 %552
      %555 = vset.pattern.permute.xlu0 2
      %556 = vperm.xlu0 %555, %v324
      %v557 = vpop.permute.xlu0 %556
      %559 = vset.pattern.permute.xlu0 2
      %560 = vperm.xlu0 %559, %v325
      %v561 = vpop.permute.xlu0 %560
      %563 = vset.pattern.permute.xlu0 2
      %564 = vperm.xlu0 %563, %v326
      %v565 = vpop.permute.xlu0 %564
      %567 = vset.pattern.permute.xlu0 2
      %568 = vperm.xlu0 %567, %v327
      %v569 = vpop.permute.xlu0 %568
      %571 = vset.pattern.permute.xlu0 2
      %572 = vperm.xlu0 %571, %v328
      %v573 = vpop.permute.xlu0 %572
      %575 = vset.pattern.permute.xlu0 2
      %576 = vperm.xlu0 %575, %v329
      %v577 = vpop.permute.xlu0 %576
      %579 = vset.pattern.permute.xlu0 2
      %580 = vperm.xlu0 %579, %v330
      %v581 = vpop.permute.xlu0 %580
      %583 = vset.pattern.permute.xlu0 2
      %584 = vperm.xlu0 %583, %v331
      %v585 = vpop.permute.xlu0 %584
      %587 = vset.pattern.permute.xlu0 2
      %588 = vperm.xlu0 %587, %v332
      %v589 = vpop.permute.xlu0 %588
      %591 = vset.pattern.permute.xlu0 2
      %592 = vperm.xlu0 %591, %v333
      %v593 = vpop.permute.xlu0 %592
      %595 = vset.pattern.permute.xlu0 2
      %596 = vperm.xlu0 %595, %v334
      %v597 = vpop.permute.xlu0 %596
      %v599 = vlaneseq
      %v600 = vshrl.u32 %v599, 7
      %v601 = vsub.s32 2, %v600
      %v602 = vrot.slane %v283, %v601
      %v603 = vmul.f32 %v537, %v602
      %v604 = vmul.f32 %v541, %v602
      %v605 = vmul.f32 %v545, %v602
      %v606 = vmul.f32 %v549, %v602
      %v607 = vmul.f32 %v553, %v602
      %v608 = vmul.f32 %v557, %v602
      %v609 = vmul.f32 %v561, %v602
      %v610 = vmul.f32 %v565, %v602
      %v611 = vmul.f32 %v569, %v602
      %v612 = vmul.f32 %v573, %v602
      %v613 = vmul.f32 %v577, %v602
      %v614 = vmul.f32 %v581, %v602
      %v615 = vmul.f32 %v585, %v602
      %v616 = vmul.f32 %v589, %v602
      %v617 = vmul.f32 %v593, %v602
      %v618 = vmul.f32 %v597, %v602
      %v619 = vadd.f32 %v519, %v603
      %v620 = vadd.f32 %v520, %v604
      %v621 = vadd.f32 %v521, %v605
      %v622 = vadd.f32 %v522, %v606
      %v623 = vadd.f32 %v523, %v607
      %v624 = vadd.f32 %v524, %v608
      %v625 = vadd.f32 %v525, %v609
      %v626 = vadd.f32 %v526, %v610
      %v627 = vadd.f32 %v527, %v611
      %v628 = vadd.f32 %v528, %v612
      %v629 = vadd.f32 %v529, %v613
      %v630 = vadd.f32 %v530, %v614
      %v631 = vadd.f32 %v531, %v615
      %v632 = vadd.f32 %v532, %v616
      %v633 = vadd.f32 %v533, %v617
      %v634 = vadd.f32 %v534, %v618
      %635 = vset.pattern.permute.xlu0 3
      %636 = vperm.xlu0 %635, %v319
      %v637 = vpop.permute.xlu0 %636
      %639 = vset.pattern.permute.xlu0 3
      %640 = vperm.xlu0 %639, %v320
      %v641 = vpop.permute.xlu0 %640
      %643 = vset.pattern.permute.xlu0 3
      %644 = vperm.xlu0 %643, %v321
      %v645 = vpop.permute.xlu0 %644
      %647 = vset.pattern.permute.xlu0 3
      %648 = vperm.xlu0 %647, %v322
      %v649 = vpop.permute.xlu0 %648
      %651 = vset.pattern.permute.xlu0 3
      %652 = vperm.xlu0 %651, %v323
      %v653 = vpop.permute.xlu0 %652
      %655 = vset.pattern.permute.xlu0 3
      %656 = vperm.xlu0 %655, %v324
      %v657 = vpop.permute.xlu0 %656
      %659 = vset.pattern.permute.xlu0 3
      %660 = vperm.xlu0 %659, %v325
      %v661 = vpop.permute.xlu0 %660
      %663 = vset.pattern.permute.xlu0 3
      %664 = vperm.xlu0 %663, %v326
      %v665 = vpop.permute.xlu0 %664
      %667 = vset.pattern.permute.xlu0 3
      %668 = vperm.xlu0 %667, %v327
      %v669 = vpop.permute.xlu0 %668
      %671 = vset.pattern.permute.xlu0 3
      %672 = vperm.xlu0 %671, %v328
      %v673 = vpop.permute.xlu0 %672
      %675 = vset.pattern.permute.xlu0 3
      %676 = vperm.xlu0 %675, %v329
      %v677 = vpop.permute.xlu0 %676
      %679 = vset.pattern.permute.xlu0 3
      %680 = vperm.xlu0 %679, %v330
      %v681 = vpop.permute.xlu0 %680
      %683 = vset.pattern.permute.xlu0 3
      %684 = vperm.xlu0 %683, %v331
      %v685 = vpop.permute.xlu0 %684
      %687 = vset.pattern.permute.xlu0 3
      %688 = vperm.xlu0 %687, %v332
      %v689 = vpop.permute.xlu0 %688
      %691 = vset.pattern.permute.xlu0 3
      %692 = vperm.xlu0 %691, %v333
      %v693 = vpop.permute.xlu0 %692
      %695 = vset.pattern.permute.xlu0 3
      %696 = vperm.xlu0 %695, %v334
      %v697 = vpop.permute.xlu0 %696
      %v699 = vlaneseq
      %v700 = vshrl.u32 %v699, 7
      %v701 = vsub.s32 3, %v700
      %v702 = vrot.slane %v283, %v701
      %v703 = vmul.f32 %v637, %v702
      %v704 = vmul.f32 %v641, %v702
      %v705 = vmul.f32 %v645, %v702
      %v706 = vmul.f32 %v649, %v702
      %v707 = vmul.f32 %v653, %v702
      %v708 = vmul.f32 %v657, %v702
      %v709 = vmul.f32 %v661, %v702
      %v710 = vmul.f32 %v665, %v702
      %v711 = vmul.f32 %v669, %v702
      %v712 = vmul.f32 %v673, %v702
      %v713 = vmul.f32 %v677, %v702
      %v714 = vmul.f32 %v681, %v702
      %v715 = vmul.f32 %v685, %v702
      %v716 = vmul.f32 %v689, %v702
      %v717 = vmul.f32 %v693, %v702
      %v718 = vmul.f32 %v697, %v702
      %v719 = vadd.f32 %v619, %v703
      %v720 = vadd.f32 %v620, %v704
      %v721 = vadd.f32 %v621, %v705
      %v722 = vadd.f32 %v622, %v706
      %v723 = vadd.f32 %v623, %v707
      %v724 = vadd.f32 %v624, %v708
      %v725 = vadd.f32 %v625, %v709
      %v726 = vadd.f32 %v626, %v710
      %v727 = vadd.f32 %v627, %v711
      %v728 = vadd.f32 %v628, %v712
      %v729 = vadd.f32 %v629, %v713
      %v730 = vadd.f32 %v630, %v714
      %v731 = vadd.f32 %v631, %v715
      %v732 = vadd.f32 %v632, %v716
      %v733 = vadd.f32 %v633, %v717
      %v734 = vadd.f32 %v634, %v718
      %v736 = vlaneseq
      %v737 = vshrl.u32 %v736, 7
      %v738 = vsub.s32 0, %v737
      %v739 = vrot.slane %v284, %v738
      %v741 = vadd.f32 %v719, %v739
      %v742 = vadd.f32 %v720, %v739
      %v743 = vadd.f32 %v721, %v739
      %v744 = vadd.f32 %v722, %v739
      %v745 = vadd.f32 %v723, %v739
      %v746 = vadd.f32 %v724, %v739
      %v747 = vadd.f32 %v725, %v739
      %v748 = vadd.f32 %v726, %v739
      %v749 = vadd.f32 %v727, %v739
      %v750 = vadd.f32 %v728, %v739
      %v751 = vadd.f32 %v729, %v739
      %v752 = vadd.f32 %v730, %v739
      %v753 = vadd.f32 %v731, %v739
      %v754 = vadd.f32 %v732, %v739
      %v755 = vadd.f32 %v733, %v739
      %v756 = vadd.f32 %v734, %v739
      %v757 = vmax.f32 %v741, 0.0
      %v758 = vmax.f32 %v742, 0.0
      %v759 = vmax.f32 %v743, 0.0
      %v760 = vmax.f32 %v744, 0.0
      %v761 = vmax.f32 %v745, 0.0
      %v762 = vmax.f32 %v746, 0.0
      %v763 = vmax.f32 %v747, 0.0
      %v764 = vmax.f32 %v748, 0.0
      %v765 = vmax.f32 %v749, 0.0
      %v766 = vmax.f32 %v750, 0.0
      %v767 = vmax.f32 %v751, 0.0
      %v768 = vmax.f32 %v752, 0.0
      %v769 = vmax.f32 %v753, 0.0
      %v770 = vmax.f32 %v754, 0.0
      %v771 = vmax.f32 %v755, 0.0
      %v772 = vmax.f32 %v756, 0.0
      %v773 = vpack.c.bf16 %v758, %v757
      %v774 = vpack.c.bf16 %v760, %v759
      %v775 = vpack.c.bf16 %v762, %v761
      %v776 = vpack.c.bf16 %v764, %v763
      %v777 = vpack.c.bf16 %v766, %v765
      %v778 = vpack.c.bf16 %v768, %v767
      %v779 = vpack.c.bf16 %v770, %v769
      %v780 = vpack.c.bf16 %v772, %v771
      %v782 = vlaneseq
      %v783 = vshrl.u32 %v782, 7
      %v784 = vsub.s32 0, %v783
      %v785 = vrot.slane %v301, %v784
      %v803 = vunpack.c.l.b16 %v285
      %v804 = vunpack.c.l.b16 %v286
      %v805 = vunpack.c.l.b16 %v287
      %v806 = vunpack.c.l.b16 %v288
      %v807 = vunpack.c.l.b16 %v289
      %v808 = vunpack.c.l.b16 %v290
      %v809 = vunpack.c.l.b16 %v291
      %v810 = vunpack.c.l.b16 %v292
      %v811 = vunpack.c.l.b16 %v293
      %v812 = vunpack.c.l.b16 %v294
      %v813 = vunpack.c.l.b16 %v295
      %v814 = vunpack.c.l.b16 %v296
      %v815 = vunpack.c.l.b16 %v297
      %v816 = vunpack.c.l.b16 %v298
      %v817 = vunpack.c.l.b16 %v299
      %v818 = vunpack.c.l.b16 %v300
      %v819 = vpack.c.b16 %v804, %v803
      %v820 = vpack.c.b16 %v806, %v805
      %v821 = vpack.c.b16 %v808, %v807
      %v822 = vpack.c.b16 %v810, %v809
      %v823 = vpack.c.b16 %v812, %v811
      %v824 = vpack.c.b16 %v814, %v813
      %v825 = vpack.c.b16 %v816, %v815
      %v826 = vpack.c.b16 %v818, %v817
      %835 = vmatprep.subr.bf16.mxu0 0
      %836 = vmatpush1.bf16.msra.mxu0 %v826
      %837 = vmatprep.subr.bf16.mxu0 0
      %838 = vmatpush1.bf16.msra.mxu0 %v825
      %839 = vmatprep.subr.bf16.mxu0 0
      %840 = vmatpush1.bf16.msra.mxu0 %v824
      %841 = vmatprep.subr.bf16.mxu0 0
      %842 = vmatpush1.bf16.msra.mxu0 %v823
      %843 = vmatprep.subr.bf16.mxu0 0
      %844 = vmatpush1.bf16.msra.mxu0 %v822
      %845 = vmatprep.subr.bf16.mxu0 0
      %846 = vmatpush1.bf16.msra.mxu0 %v821
      %847 = vmatprep.subr.bf16.mxu0 0
      %848 = vmatpush1.bf16.msra.mxu0 %v820
      %849 = vmatprep.subr.bf16.mxu0 0
      %850 = vmatpush1.bf16.msra.mxu0 %v819
      %851 = vmatprep.subr.bf16.mxu0 0
      %852 = vmatpush2.bf16.msra.mxu0 0
      %853 = vmatprep.subr.bf16.mxu0 0
      %854 = vmatpush2.bf16.msra.mxu0 0
      %855 = vmatprep.subr.bf16.mxu0 0
      %856 = vmatpush2.bf16.msra.mxu0 0
      %857 = vmatprep.subr.bf16.mxu0 0
      %858 = vmatpush2.bf16.msra.mxu0 0
      %859 = vmatprep.subr.bf16.mxu0 0
      %860 = vmatpush2.bf16.msra.mxu0 0
      %861 = vmatprep.subr.bf16.mxu0 0
      %862 = vmatpush2.bf16.msra.mxu0 0
      %863 = vmatprep.subr.bf16.mxu0 0
      %864 = vmatpush2.bf16.msra.mxu0 0
      %865 = vmatprep.subr.bf16.mxu0 0
      %866 = vmatpush2.bf16.msra.mxu0 0
      %867 = vmatprep.mubr.bf16.mxu0 0
      %868 = vmatmul.mubr.bf16.gmra.mxu0 %v773
      %v869 = vpop.f32.mrf.mxu0
      %v870 = vadd.f32 %v785, %v869
      %v871 = vpop.f32.mrf.mxu0
      %v872 = vpop.f32.mrf.mxu0
      %v873 = vadd.f32 %v785, %v872
      %v874 = vpop.f32.mrf.mxu0
      %875 = vmatprep.mubr.bf16.mxu0 0
      %876 = vmatmul.mubr.bf16.gmra.mxu0 %v774
      %v877 = vpop.f32.mrf.mxu0
      %v878 = vadd.f32 %v785, %v877
      %v879 = vpop.f32.mrf.mxu0
      %v880 = vpop.f32.mrf.mxu0
      %v881 = vadd.f32 %v785, %v880
      %v882 = vpop.f32.mrf.mxu0
      %883 = vmatprep.mubr.bf16.mxu0 0
      %884 = vmatmul.mubr.bf16.gmra.mxu0 %v775
      %v885 = vpop.f32.mrf.mxu0
      %v886 = vadd.f32 %v785, %v885
      %v887 = vpop.f32.mrf.mxu0
      %v888 = vpop.f32.mrf.mxu0
      %v889 = vadd.f32 %v785, %v888
      %v890 = vpop.f32.mrf.mxu0
      %891 = vmatprep.mubr.bf16.mxu0 0
      %892 = vmatmul.mubr.bf16.gmra.mxu0 %v776
      %v893 = vpop.f32.mrf.mxu0
      %v894 = vadd.f32 %v785, %v893
      %v895 = vpop.f32.mrf.mxu0
      %v896 = vpop.f32.mrf.mxu0
      %v897 = vadd.f32 %v785, %v896
      %v898 = vpop.f32.mrf.mxu0
      %899 = vmatprep.mubr.bf16.mxu0 0
      %900 = vmatmul.mubr.bf16.gmra.mxu0 %v777
      %v901 = vpop.f32.mrf.mxu0
      %v902 = vadd.f32 %v785, %v901
      %v903 = vpop.f32.mrf.mxu0
      %v904 = vpop.f32.mrf.mxu0
      %v905 = vadd.f32 %v785, %v904
      %v906 = vpop.f32.mrf.mxu0
      %907 = vmatprep.mubr.bf16.mxu0 0
      %908 = vmatmul.mubr.bf16.gmra.mxu0 %v778
      %v909 = vpop.f32.mrf.mxu0
      %v910 = vadd.f32 %v785, %v909
      %v911 = vpop.f32.mrf.mxu0
      %v912 = vpop.f32.mrf.mxu0
      %v913 = vadd.f32 %v785, %v912
      %v914 = vpop.f32.mrf.mxu0
      %915 = vmatprep.mubr.bf16.mxu0 0
      %916 = vmatmul.mubr.bf16.gmra.mxu0 %v779
      %v917 = vpop.f32.mrf.mxu0
      %v918 = vadd.f32 %v785, %v917
      %v919 = vpop.f32.mrf.mxu0
      %v920 = vpop.f32.mrf.mxu0
      %v921 = vadd.f32 %v785, %v920
      %v922 = vpop.f32.mrf.mxu0
      %923 = vmatprep.mubr.bf16.mxu0 0
      %924 = vmatmul.mubr.bf16.gmra.mxu0 %v780
      %v925 = vpop.f32.mrf.mxu0
      %v926 = vadd.f32 %v785, %v925
      %v927 = vpop.f32.mrf.mxu0
      %v928 = vpop.f32.mrf.mxu0
      %v929 = vadd.f32 %v785, %v928
      %v930 = vpop.f32.mrf.mxu0
      %931 = vdwg.mxu0
      %v932 = vmax.f32 %v870, 0.0
      %v933 = vmax.f32 %v873, 0.0
      %v934 = vmax.f32 %v878, 0.0
      %v935 = vmax.f32 %v881, 0.0
      %v936 = vmax.f32 %v886, 0.0
      %v937 = vmax.f32 %v889, 0.0
      %v938 = vmax.f32 %v894, 0.0
      %v939 = vmax.f32 %v897, 0.0
      %v940 = vmax.f32 %v902, 0.0
      %v941 = vmax.f32 %v905, 0.0
      %v942 = vmax.f32 %v910, 0.0
      %v943 = vmax.f32 %v913, 0.0
      %v944 = vmax.f32 %v918, 0.0
      %v945 = vmax.f32 %v921, 0.0
      %v946 = vmax.f32 %v926, 0.0
      %v947 = vmax.f32 %v929, 0.0
      %v948 = vpack.c.bf16 %v933, %v932
      %v949 = vpack.c.bf16 %v935, %v934
      %v950 = vpack.c.bf16 %v937, %v936
      %v951 = vpack.c.bf16 %v939, %v938
      %v952 = vpack.c.bf16 %v941, %v940
      %v953 = vpack.c.bf16 %v943, %v942
      %v954 = vpack.c.bf16 %v945, %v944
      %v955 = vpack.c.bf16 %v947, %v946
      %v957 = vlaneseq
      %v958 = vshrl.u32 %v957, 7
      %v959 = vsub.s32 0, %v958
      %v960 = vrot.slane %v318, %v959
      %v978 = vunpack.c.l.b16 %v302
      %v979 = vunpack.c.l.b16 %v303
      %v980 = vunpack.c.l.b16 %v304
      %v981 = vunpack.c.l.b16 %v305
      %v982 = vunpack.c.l.b16 %v306
      %v983 = vunpack.c.l.b16 %v307
      %v984 = vunpack.c.l.b16 %v308
      %v985 = vunpack.c.l.b16 %v309
      %v986 = vunpack.c.l.b16 %v310
      %v987 = vunpack.c.l.b16 %v311
      %v988 = vunpack.c.l.b16 %v312
      %v989 = vunpack.c.l.b16 %v313
      %v990 = vunpack.c.l.b16 %v314
      %v991 = vunpack.c.l.b16 %v315
      %v992 = vunpack.c.l.b16 %v316
      %v993 = vunpack.c.l.b16 %v317
      %v994 = vpack.c.b16 %v979, %v978
      %v995 = vpack.c.b16 %v981, %v980
      %v996 = vpack.c.b16 %v983, %v982
      %v997 = vpack.c.b16 %v985, %v984
      %v998 = vpack.c.b16 %v987, %v986
      %v999 = vpack.c.b16 %v989, %v988
      %v1000 = vpack.c.b16 %v991, %v990
      %v1001 = vpack.c.b16 %v993, %v992
      %1010 = vmatprep.subr.bf16.mxu0 0
      %1011 = vmatpush1.bf16.msra.mxu0 %v1001
      %1012 = vmatprep.subr.bf16.mxu0 0
      %1013 = vmatpush1.bf16.msra.mxu0 %v1000
      %1014 = vmatprep.subr.bf16.mxu0 0
      %1015 = vmatpush1.bf16.msra.mxu0 %v999
      %1016 = vmatprep.subr.bf16.mxu0 0
      %1017 = vmatpush1.bf16.msra.mxu0 %v998
      %1018 = vmatprep.subr.bf16.mxu0 0
      %1019 = vmatpush1.bf16.msra.mxu0 %v997
      %1020 = vmatprep.subr.bf16.mxu0 0
      %1021 = vmatpush1.bf16.msra.mxu0 %v996
      %1022 = vmatprep.subr.bf16.mxu0 0
      %1023 = vmatpush1.bf16.msra.mxu0 %v995
      %1024 = vmatprep.subr.bf16.mxu0 0
      %1025 = vmatpush1.bf16.msra.mxu0 %v994
      %1026 = vmatprep.subr.bf16.mxu0 0
      %1027 = vmatpush2.bf16.msra.mxu0 0
      %1028 = vmatprep.subr.bf16.mxu0 0
      %1029 = vmatpush2.bf16.msra.mxu0 0
      %1030 = vmatprep.subr.bf16.mxu0 0
      %1031 = vmatpush2.bf16.msra.mxu0 0
      %1032 = vmatprep.subr.bf16.mxu0 0
      %1033 = vmatpush2.bf16.msra.mxu0 0
      %1034 = vmatprep.subr.bf16.mxu0 0
      %1035 = vmatpush2.bf16.msra.mxu0 0
      %1036 = vmatprep.subr.bf16.mxu0 0
      %1037 = vmatpush2.bf16.msra.mxu0 0
      %1038 = vmatprep.subr.bf16.mxu0 0
      %1039 = vmatpush2.bf16.msra.mxu0 0
      %1040 = vmatprep.subr.bf16.mxu0 0
      %1041 = vmatpush2.bf16.msra.mxu0 0
      %1042 = vmatprep.mubr.bf16.mxu0 0
      %1043 = vmatmul.mubr.bf16.gmra.mxu0 %v948
      %v1044 = vpop.f32.mrf.mxu0
      %v1045 = vadd.f32 %v960, %v1044
      %v1046 = vpop.f32.mrf.mxu0
      %v1047 = vpop.f32.mrf.mxu0
      %v1048 = vadd.f32 %v960, %v1047
      %v1049 = vpop.f32.mrf.mxu0
      %1050 = vmatprep.mubr.bf16.mxu0 0
      %1051 = vmatmul.mubr.bf16.gmra.mxu0 %v949
      %v1052 = vpop.f32.mrf.mxu0
      %v1053 = vadd.f32 %v960, %v1052
      %v1054 = vpop.f32.mrf.mxu0
      %v1055 = vpop.f32.mrf.mxu0
      %v1056 = vadd.f32 %v960, %v1055
      %v1057 = vpop.f32.mrf.mxu0
      %1058 = vmatprep.mubr.bf16.mxu0 0
      %1059 = vmatmul.mubr.bf16.gmra.mxu0 %v950
      %v1060 = vpop.f32.mrf.mxu0
      %v1061 = vadd.f32 %v960, %v1060
      %v1062 = vpop.f32.mrf.mxu0
      %v1063 = vpop.f32.mrf.mxu0
      %v1064 = vadd.f32 %v960, %v1063
      %v1065 = vpop.f32.mrf.mxu0
      %1066 = vmatprep.mubr.bf16.mxu0 0
      %1067 = vmatmul.mubr.bf16.gmra.mxu0 %v951
      %v1068 = vpop.f32.mrf.mxu0
      %v1069 = vadd.f32 %v960, %v1068
      %v1070 = vpop.f32.mrf.mxu0
      %v1071 = vpop.f32.mrf.mxu0
      %v1072 = vadd.f32 %v960, %v1071
      %v1073 = vpop.f32.mrf.mxu0
      %1074 = vmatprep.mubr.bf16.mxu0 0
      %1075 = vmatmul.mubr.bf16.gmra.mxu0 %v952
      %v1076 = vpop.f32.mrf.mxu0
      %v1077 = vadd.f32 %v960, %v1076
      %v1078 = vpop.f32.mrf.mxu0
      %v1079 = vpop.f32.mrf.mxu0
      %v1080 = vadd.f32 %v960, %v1079
      %v1081 = vpop.f32.mrf.mxu0
      %1082 = vmatprep.mubr.bf16.mxu0 0
      %1083 = vmatmul.mubr.bf16.gmra.mxu0 %v953
      %v1084 = vpop.f32.mrf.mxu0
      %v1085 = vadd.f32 %v960, %v1084
      %v1086 = vpop.f32.mrf.mxu0
      %v1087 = vpop.f32.mrf.mxu0
      %v1088 = vadd.f32 %v960, %v1087
      %v1089 = vpop.f32.mrf.mxu0
      %1090 = vmatprep.mubr.bf16.mxu0 0
      %1091 = vmatmul.mubr.bf16.gmra.mxu0 %v954
      %v1092 = vpop.f32.mrf.mxu0
      %v1093 = vadd.f32 %v960, %v1092
      %v1094 = vpop.f32.mrf.mxu0
      %v1095 = vpop.f32.mrf.mxu0
      %v1096 = vadd.f32 %v960, %v1095
      %v1097 = vpop.f32.mrf.mxu0
      %1098 = vmatprep.mubr.bf16.mxu0 0
      %1099 = vmatmul.mubr.bf16.gmra.mxu0 %v955
      %v1100 = vpop.f32.mrf.mxu0
      %v1101 = vadd.f32 %v960, %v1100
      %v1102 = vpop.f32.mrf.mxu0
      %v1103 = vpop.f32.mrf.mxu0
      %v1104 = vadd.f32 %v960, %v1103
      %v1105 = vpop.f32.mrf.mxu0
      %1106 = vdwg.mxu0
      %vm1107 = vcmask 64512
      %1108 = vst.msk [vmem:[%s280] sm:$0xff] %vm1107, %v1045
      %1109 = vst.msk [vmem:[%s280 + $0x8] sm:$0xff] %vm1107, %v1048
      %1110 = vst.msk [vmem:[%s280 + $0x10] sm:$0xff] %vm1107, %v1053
      %1111 = vst.msk [vmem:[%s280 + $0x18] sm:$0xff] %vm1107, %v1056
      %1112 = vst.msk [vmem:[%s280 + $0x20] sm:$0xff] %vm1107, %v1061
      %1113 = vst.msk [vmem:[%s280 + $0x28] sm:$0xff] %vm1107, %v1064
      %1114 = vst.msk [vmem:[%s280 + $0x30] sm:$0xff] %vm1107, %v1069
      %1115 = vst.msk [vmem:[%s280 + $0x38] sm:$0xff] %vm1107, %v1072
      %1116 = vst.msk [vmem:[%s280 + $0x40] sm:$0xff] %vm1107, %v1077
      %1117 = vst.msk [vmem:[%s280 + $0x48] sm:$0xff] %vm1107, %v1080
      %1118 = vst.msk [vmem:[%s280 + $0x50] sm:$0xff] %vm1107, %v1085
      %1119 = vst.msk [vmem:[%s280 + $0x58] sm:$0xff] %vm1107, %v1088
      %1120 = vst.msk [vmem:[%s280 + $0x60] sm:$0xff] %vm1107, %v1093
      %1121 = vst.msk [vmem:[%s280 + $0x68] sm:$0xff] %vm1107, %v1096
      %1122 = vst.msk [vmem:[%s280 + $0x70] sm:$0xff] %vm1107, %v1101
      %1123 = vst.msk [vmem:[%s280 + $0x78] sm:$0xff] %vm1107, %v1104
      %s1124 = scalar_lea.vmem %s274, 128
      %v1125 = vld [vmem:[%s1124] sm:$0xff]
      %v1126 = vld [vmem:[%s1124 + $0x8] sm:$0xff]
      %v1127 = vld [vmem:[%s1124 + $0x10] sm:$0xff]
      %v1128 = vld [vmem:[%s1124 + $0x18] sm:$0xff]
      %v1129 = vld [vmem:[%s1124 + $0x20] sm:$0xff]
      %v1130 = vld [vmem:[%s1124 + $0x28] sm:$0xff]
      %v1131 = vld [vmem:[%s1124 + $0x30] sm:$0xff]
      %v1132 = vld [vmem:[%s1124 + $0x38] sm:$0xff]
      %v1133 = vld [vmem:[%s1124 + $0x40] sm:$0xff]
      %v1134 = vld [vmem:[%s1124 + $0x48] sm:$0xff]
      %v1135 = vld [vmem:[%s1124 + $0x50] sm:$0xff]
      %v1136 = vld [vmem:[%s1124 + $0x58] sm:$0xff]
      %v1137 = vld [vmem:[%s1124 + $0x60] sm:$0xff]
      %v1138 = vld [vmem:[%s1124 + $0x68] sm:$0xff]
      %v1139 = vld [vmem:[%s1124 + $0x70] sm:$0xff]
      %v1140 = vld [vmem:[%s1124 + $0x78] sm:$0xff]
      %1142 = vset.pattern.permute.xlu0 0
      %1143 = vperm.xlu0 %1142, %v1125
      %v1144 = vpop.permute.xlu0 %1143
      %1147 = vset.pattern.permute.xlu0 0
      %1148 = vperm.xlu0 %1147, %v1126
      %v1149 = vpop.permute.xlu0 %1148
      %1152 = vset.pattern.permute.xlu0 0
      %1153 = vperm.xlu0 %1152, %v1127
      %v1154 = vpop.permute.xlu0 %1153
      %1157 = vset.pattern.permute.xlu0 0
      %1158 = vperm.xlu0 %1157, %v1128
      %v1159 = vpop.permute.xlu0 %1158
      %1162 = vset.pattern.permute.xlu0 0
      %1163 = vperm.xlu0 %1162, %v1129
      %v1164 = vpop.permute.xlu0 %1163
      %1167 = vset.pattern.permute.xlu0 0
      %1168 = vperm.xlu0 %1167, %v1130
      %v1169 = vpop.permute.xlu0 %1168
      %1172 = vset.pattern.permute.xlu0 0
      %1173 = vperm.xlu0 %1172, %v1131
      %v1174 = vpop.permute.xlu0 %1173
      %1177 = vset.pattern.permute.xlu0 0
      %1178 = vperm.xlu0 %1177, %v1132
      %v1179 = vpop.permute.xlu0 %1178
      %1182 = vset.pattern.permute.xlu0 0
      %1183 = vperm.xlu0 %1182, %v1133
      %v1184 = vpop.permute.xlu0 %1183
      %1187 = vset.pattern.permute.xlu0 0
      %1188 = vperm.xlu0 %1187, %v1134
      %v1189 = vpop.permute.xlu0 %1188
      %1192 = vset.pattern.permute.xlu0 0
      %1193 = vperm.xlu0 %1192, %v1135
      %v1194 = vpop.permute.xlu0 %1193
      %1197 = vset.pattern.permute.xlu0 0
      %1198 = vperm.xlu0 %1197, %v1136
      %v1199 = vpop.permute.xlu0 %1198
      %1202 = vset.pattern.permute.xlu0 0
      %1203 = vperm.xlu0 %1202, %v1137
      %v1204 = vpop.permute.xlu0 %1203
      %1207 = vset.pattern.permute.xlu0 0
      %1208 = vperm.xlu0 %1207, %v1138
      %v1209 = vpop.permute.xlu0 %1208
      %1212 = vset.pattern.permute.xlu0 0
      %1213 = vperm.xlu0 %1212, %v1139
      %v1214 = vpop.permute.xlu0 %1213
      %1217 = vset.pattern.permute.xlu0 0
      %1218 = vperm.xlu0 %1217, %v1140
      %v1219 = vpop.permute.xlu0 %1218
      %v1221 = vmul.f32 %v1144, %v418
      %v1222 = vmul.f32 %v1149, %v418
      %v1223 = vmul.f32 %v1154, %v418
      %v1224 = vmul.f32 %v1159, %v418
      %v1225 = vmul.f32 %v1164, %v418
      %v1226 = vmul.f32 %v1169, %v418
      %v1227 = vmul.f32 %v1174, %v418
      %v1228 = vmul.f32 %v1179, %v418
      %v1229 = vmul.f32 %v1184, %v418
      %v1230 = vmul.f32 %v1189, %v418
      %v1231 = vmul.f32 %v1194, %v418
      %v1232 = vmul.f32 %v1199, %v418
      %v1233 = vmul.f32 %v1204, %v418
      %v1234 = vmul.f32 %v1209, %v418
      %v1235 = vmul.f32 %v1214, %v418
      %v1236 = vmul.f32 %v1219, %v418
      %1237 = vset.pattern.permute.xlu0 1
      %1238 = vperm.xlu0 %1237, %v1125
      %v1239 = vpop.permute.xlu0 %1238
      %1241 = vset.pattern.permute.xlu0 1
      %1242 = vperm.xlu0 %1241, %v1126
      %v1243 = vpop.permute.xlu0 %1242
      %1245 = vset.pattern.permute.xlu0 1
      %1246 = vperm.xlu0 %1245, %v1127
      %v1247 = vpop.permute.xlu0 %1246
      %1249 = vset.pattern.permute.xlu0 1
      %1250 = vperm.xlu0 %1249, %v1128
      %v1251 = vpop.permute.xlu0 %1250
      %1253 = vset.pattern.permute.xlu0 1
      %1254 = vperm.xlu0 %1253, %v1129
      %v1255 = vpop.permute.xlu0 %1254
      %1257 = vset.pattern.permute.xlu0 1
      %1258 = vperm.xlu0 %1257, %v1130
      %v1259 = vpop.permute.xlu0 %1258
      %1261 = vset.pattern.permute.xlu0 1
      %1262 = vperm.xlu0 %1261, %v1131
      %v1263 = vpop.permute.xlu0 %1262
      %1265 = vset.pattern.permute.xlu0 1
      %1266 = vperm.xlu0 %1265, %v1132
      %v1267 = vpop.permute.xlu0 %1266
      %1269 = vset.pattern.permute.xlu0 1
      %1270 = vperm.xlu0 %1269, %v1133
      %v1271 = vpop.permute.xlu0 %1270
      %1273 = vset.pattern.permute.xlu0 1
      %1274 = vperm.xlu0 %1273, %v1134
      %v1275 = vpop.permute.xlu0 %1274
      %1277 = vset.pattern.permute.xlu0 1
      %1278 = vperm.xlu0 %1277, %v1135
      %v1279 = vpop.permute.xlu0 %1278
      %1281 = vset.pattern.permute.xlu0 1
      %1282 = vperm.xlu0 %1281, %v1136
      %v1283 = vpop.permute.xlu0 %1282
      %1285 = vset.pattern.permute.xlu0 1
      %1286 = vperm.xlu0 %1285, %v1137
      %v1287 = vpop.permute.xlu0 %1286
      %1289 = vset.pattern.permute.xlu0 1
      %1290 = vperm.xlu0 %1289, %v1138
      %v1291 = vpop.permute.xlu0 %1290
      %1293 = vset.pattern.permute.xlu0 1
      %1294 = vperm.xlu0 %1293, %v1139
      %v1295 = vpop.permute.xlu0 %1294
      %1297 = vset.pattern.permute.xlu0 1
      %1298 = vperm.xlu0 %1297, %v1140
      %v1299 = vpop.permute.xlu0 %1298
      %v1301 = vmul.f32 %v1239, %v502
      %v1302 = vmul.f32 %v1243, %v502
      %v1303 = vmul.f32 %v1247, %v502
      %v1304 = vmul.f32 %v1251, %v502
      %v1305 = vmul.f32 %v1255, %v502
      %v1306 = vmul.f32 %v1259, %v502
      %v1307 = vmul.f32 %v1263, %v502
      %v1308 = vmul.f32 %v1267, %v502
      %v1309 = vmul.f32 %v1271, %v502
      %v1310 = vmul.f32 %v1275, %v502
      %v1311 = vmul.f32 %v1279, %v502
      %v1312 = vmul.f32 %v1283, %v502
      %v1313 = vmul.f32 %v1287, %v502
      %v1314 = vmul.f32 %v1291, %v502
      %v1315 = vmul.f32 %v1295, %v502
      %v1316 = vmul.f32 %v1299, %v502
      %v1317 = vadd.f32 %v1221, %v1301
      %v1318 = vadd.f32 %v1222, %v1302
      %v1319 = vadd.f32 %v1223, %v1303
      %v1320 = vadd.f32 %v1224, %v1304
      %v1321 = vadd.f32 %v1225, %v1305
      %v1322 = vadd.f32 %v1226, %v1306
      %v1323 = vadd.f32 %v1227, %v1307
      %v1324 = vadd.f32 %v1228, %v1308
      %v1325 = vadd.f32 %v1229, %v1309
      %v1326 = vadd.f32 %v1230, %v1310
      %v1327 = vadd.f32 %v1231, %v1311
      %v1328 = vadd.f32 %v1232, %v1312
      %v1329 = vadd.f32 %v1233, %v1313
      %v1330 = vadd.f32 %v1234, %v1314
      %v1331 = vadd.f32 %v1235, %v1315
      %v1332 = vadd.f32 %v1236, %v1316
      %1333 = vset.pattern.permute.xlu0 2
      %1334 = vperm.xlu0 %1333, %v1125
      %v1335 = vpop.permute.xlu0 %1334
      %1337 = vset.pattern.permute.xlu0 2
      %1338 = vperm.xlu0 %1337, %v1126
      %v1339 = vpop.permute.xlu0 %1338
      %1341 = vset.pattern.permute.xlu0 2
      %1342 = vperm.xlu0 %1341, %v1127
      %v1343 = vpop.permute.xlu0 %1342
      %1345 = vset.pattern.permute.xlu0 2
      %1346 = vperm.xlu0 %1345, %v1128
      %v1347 = vpop.permute.xlu0 %1346
      %1349 = vset.pattern.permute.xlu0 2
      %1350 = vperm.xlu0 %1349, %v1129
      %v1351 = vpop.permute.xlu0 %1350
      %1353 = vset.pattern.permute.xlu0 2
      %1354 = vperm.xlu0 %1353, %v1130
      %v1355 = vpop.permute.xlu0 %1354
      %1357 = vset.pattern.permute.xlu0 2
      %1358 = vperm.xlu0 %1357, %v1131
      %v1359 = vpop.permute.xlu0 %1358
      %1361 = vset.pattern.permute.xlu0 2
      %1362 = vperm.xlu0 %1361, %v1132
      %v1363 = vpop.permute.xlu0 %1362
      %1365 = vset.pattern.permute.xlu0 2
      %1366 = vperm.xlu0 %1365, %v1133
      %v1367 = vpop.permute.xlu0 %1366
      %1369 = vset.pattern.permute.xlu0 2
      %1370 = vperm.xlu0 %1369, %v1134
      %v1371 = vpop.permute.xlu0 %1370
      %1373 = vset.pattern.permute.xlu0 2
      %1374 = vperm.xlu0 %1373, %v1135
      %v1375 = vpop.permute.xlu0 %1374
      %1377 = vset.pattern.permute.xlu0 2
      %1378 = vperm.xlu0 %1377, %v1136
      %v1379 = vpop.permute.xlu0 %1378
      %1381 = vset.pattern.permute.xlu0 2
      %1382 = vperm.xlu0 %1381, %v1137
      %v1383 = vpop.permute.xlu0 %1382
      %1385 = vset.pattern.permute.xlu0 2
      %1386 = vperm.xlu0 %1385, %v1138
      %v1387 = vpop.permute.xlu0 %1386
      %1389 = vset.pattern.permute.xlu0 2
      %1390 = vperm.xlu0 %1389, %v1139
      %v1391 = vpop.permute.xlu0 %1390
      %1393 = vset.pattern.permute.xlu0 2
      %1394 = vperm.xlu0 %1393, %v1140
      %v1395 = vpop.permute.xlu0 %1394
      %v1397 = vmul.f32 %v1335, %v602
      %v1398 = vmul.f32 %v1339, %v602
      %v1399 = vmul.f32 %v1343, %v602
      %v1400 = vmul.f32 %v1347, %v602
      %v1401 = vmul.f32 %v1351, %v602
      %v1402 = vmul.f32 %v1355, %v602
      %v1403 = vmul.f32 %v1359, %v602
      %v1404 = vmul.f32 %v1363, %v602
      %v1405 = vmul.f32 %v1367, %v602
      %v1406 = vmul.f32 %v1371, %v602
      %v1407 = vmul.f32 %v1375, %v602
      %v1408 = vmul.f32 %v1379, %v602
      %v1409 = vmul.f32 %v1383, %v602
      %v1410 = vmul.f32 %v1387, %v602
      %v1411 = vmul.f32 %v1391, %v602
      %v1412 = vmul.f32 %v1395, %v602
      %v1413 = vadd.f32 %v1317, %v1397
      %v1414 = vadd.f32 %v1318, %v1398
      %v1415 = vadd.f32 %v1319, %v1399
      %v1416 = vadd.f32 %v1320, %v1400
      %v1417 = vadd.f32 %v1321, %v1401
      %v1418 = vadd.f32 %v1322, %v1402
      %v1419 = vadd.f32 %v1323, %v1403
      %v1420 = vadd.f32 %v1324, %v1404
      %v1421 = vadd.f32 %v1325, %v1405
      %v1422 = vadd.f32 %v1326, %v1406
      %v1423 = vadd.f32 %v1327, %v1407
      %v1424 = vadd.f32 %v1328, %v1408
      %v1425 = vadd.f32 %v1329, %v1409
      %v1426 = vadd.f32 %v1330, %v1410
      %v1427 = vadd.f32 %v1331, %v1411
      %v1428 = vadd.f32 %v1332, %v1412
      %1429 = vset.pattern.permute.xlu0 3
      %1430 = vperm.xlu0 %1429, %v1125
      %v1431 = vpop.permute.xlu0 %1430
      %1433 = vset.pattern.permute.xlu0 3
      %1434 = vperm.xlu0 %1433, %v1126
      %v1435 = vpop.permute.xlu0 %1434
      %1437 = vset.pattern.permute.xlu0 3
      %1438 = vperm.xlu0 %1437, %v1127
      %v1439 = vpop.permute.xlu0 %1438
      %1441 = vset.pattern.permute.xlu0 3
      %1442 = vperm.xlu0 %1441, %v1128
      %v1443 = vpop.permute.xlu0 %1442
      %1445 = vset.pattern.permute.xlu0 3
      %1446 = vperm.xlu0 %1445, %v1129
      %v1447 = vpop.permute.xlu0 %1446
      %1449 = vset.pattern.permute.xlu0 3
      %1450 = vperm.xlu0 %1449, %v1130
      %v1451 = vpop.permute.xlu0 %1450
      %1453 = vset.pattern.permute.xlu0 3
      %1454 = vperm.xlu0 %1453, %v1131
      %v1455 = vpop.permute.xlu0 %1454
      %1457 = vset.pattern.permute.xlu0 3
      %1458 = vperm.xlu0 %1457, %v1132
      %v1459 = vpop.permute.xlu0 %1458
      %1461 = vset.pattern.permute.xlu0 3
      %1462 = vperm.xlu0 %1461, %v1133
      %v1463 = vpop.permute.xlu0 %1462
      %1465 = vset.pattern.permute.xlu0 3
      %1466 = vperm.xlu0 %1465, %v1134
      %v1467 = vpop.permute.xlu0 %1466
      %1469 = vset.pattern.permute.xlu0 3
      %1470 = vperm.xlu0 %1469, %v1135
      %v1471 = vpop.permute.xlu0 %1470
      %1473 = vset.pattern.permute.xlu0 3
      %1474 = vperm.xlu0 %1473, %v1136
      %v1475 = vpop.permute.xlu0 %1474
      %1477 = vset.pattern.permute.xlu0 3
      %1478 = vperm.xlu0 %1477, %v1137
      %v1479 = vpop.permute.xlu0 %1478
      %1481 = vset.pattern.permute.xlu0 3
      %1482 = vperm.xlu0 %1481, %v1138
      %v1483 = vpop.permute.xlu0 %1482
      %1485 = vset.pattern.permute.xlu0 3
      %1486 = vperm.xlu0 %1485, %v1139
      %v1487 = vpop.permute.xlu0 %1486
      %1489 = vset.pattern.permute.xlu0 3
      %1490 = vperm.xlu0 %1489, %v1140
      %v1491 = vpop.permute.xlu0 %1490
      %v1493 = vmul.f32 %v1431, %v702
      %v1494 = vmul.f32 %v1435, %v702
      %v1495 = vmul.f32 %v1439, %v702
      %v1496 = vmul.f32 %v1443, %v702
      %v1497 = vmul.f32 %v1447, %v702
      %v1498 = vmul.f32 %v1451, %v702
      %v1499 = vmul.f32 %v1455, %v702
      %v1500 = vmul.f32 %v1459, %v702
      %v1501 = vmul.f32 %v1463, %v702
      %v1502 = vmul.f32 %v1467, %v702
      %v1503 = vmul.f32 %v1471, %v702
      %v1504 = vmul.f32 %v1475, %v702
      %v1505 = vmul.f32 %v1479, %v702
      %v1506 = vmul.f32 %v1483, %v702
      %v1507 = vmul.f32 %v1487, %v702
      %v1508 = vmul.f32 %v1491, %v702
      %v1509 = vadd.f32 %v1413, %v1493
      %v1510 = vadd.f32 %v1414, %v1494
      %v1511 = vadd.f32 %v1415, %v1495
      %v1512 = vadd.f32 %v1416, %v1496
      %v1513 = vadd.f32 %v1417, %v1497
      %v1514 = vadd.f32 %v1418, %v1498
      %v1515 = vadd.f32 %v1419, %v1499
      %v1516 = vadd.f32 %v1420, %v1500
      %v1517 = vadd.f32 %v1421, %v1501
      %v1518 = vadd.f32 %v1422, %v1502
      %v1519 = vadd.f32 %v1423, %v1503
      %v1520 = vadd.f32 %v1424, %v1504
      %v1521 = vadd.f32 %v1425, %v1505
      %v1522 = vadd.f32 %v1426, %v1506
      %v1523 = vadd.f32 %v1427, %v1507
      %v1524 = vadd.f32 %v1428, %v1508
      %v1525 = vadd.f32 %v1509, %v739
      %v1526 = vadd.f32 %v1510, %v739
      %v1527 = vadd.f32 %v1511, %v739
      %v1528 = vadd.f32 %v1512, %v739
      %v1529 = vadd.f32 %v1513, %v739
      %v1530 = vadd.f32 %v1514, %v739
      %v1531 = vadd.f32 %v1515, %v739
      %v1532 = vadd.f32 %v1516, %v739
      %v1533 = vadd.f32 %v1517, %v739
      %v1534 = vadd.f32 %v1518, %v739
      %v1535 = vadd.f32 %v1519, %v739
      %v1536 = vadd.f32 %v1520, %v739
      %v1537 = vadd.f32 %v1521, %v739
      %v1538 = vadd.f32 %v1522, %v739
      %v1539 = vadd.f32 %v1523, %v739
      %v1540 = vadd.f32 %v1524, %v739
      %v1541 = vmax.f32 %v1525, 0.0
      %v1542 = vmax.f32 %v1526, 0.0
      %v1543 = vmax.f32 %v1527, 0.0
      %v1544 = vmax.f32 %v1528, 0.0
      %v1545 = vmax.f32 %v1529, 0.0
      %v1546 = vmax.f32 %v1530, 0.0
      %v1547 = vmax.f32 %v1531, 0.0
      %v1548 = vmax.f32 %v1532, 0.0
      %v1549 = vmax.f32 %v1533, 0.0
      %v1550 = vmax.f32 %v1534, 0.0
      %v1551 = vmax.f32 %v1535, 0.0
      %v1552 = vmax.f32 %v1536, 0.0
      %v1553 = vmax.f32 %v1537, 0.0
      %v1554 = vmax.f32 %v1538, 0.0
      %v1555 = vmax.f32 %v1539, 0.0
      %v1556 = vmax.f32 %v1540, 0.0
      %v1557 = vpack.c.bf16 %v1542, %v1541
      %v1558 = vpack.c.bf16 %v1544, %v1543
      %v1559 = vpack.c.bf16 %v1546, %v1545
      %v1560 = vpack.c.bf16 %v1548, %v1547
      %v1561 = vpack.c.bf16 %v1550, %v1549
      %v1562 = vpack.c.bf16 %v1552, %v1551
      %v1563 = vpack.c.bf16 %v1554, %v1553
      %v1564 = vpack.c.bf16 %v1556, %v1555
      %1565 = vmatprep.subr.bf16.mxu0 0
      %1566 = vmatpush1.bf16.msra.mxu0 %v826
      %1567 = vmatprep.subr.bf16.mxu0 0
      %1568 = vmatpush1.bf16.msra.mxu0 %v825
      %1569 = vmatprep.subr.bf16.mxu0 0
      %1570 = vmatpush1.bf16.msra.mxu0 %v824
      %1571 = vmatprep.subr.bf16.mxu0 0
      %1572 = vmatpush1.bf16.msra.mxu0 %v823
      %1573 = vmatprep.subr.bf16.mxu0 0
      %1574 = vmatpush1.bf16.msra.mxu0 %v822
      %1575 = vmatprep.subr.bf16.mxu0 0
      %1576 = vmatpush1.bf16.msra.mxu0 %v821
      %1577 = vmatprep.subr.bf16.mxu0 0
      %1578 = vmatpush1.bf16.msra.mxu0 %v820
      %1579 = vmatprep.subr.bf16.mxu0 0
      %1580 = vmatpush1.bf16.msra.mxu0 %v819
      %1581 = vmatprep.subr.bf16.mxu0 0
      %1582 = vmatpush2.bf16.msra.mxu0 0
      %1583 = vmatprep.subr.bf16.mxu0 0
      %1584 = vmatpush2.bf16.msra.mxu0 0
      %1585 = vmatprep.subr.bf16.mxu0 0
      %1586 = vmatpush2.bf16.msra.mxu0 0
      %1587 = vmatprep.subr.bf16.mxu0 0
      %1588 = vmatpush2.bf16.msra.mxu0 0
      %1589 = vmatprep.subr.bf16.mxu0 0
      %1590 = vmatpush2.bf16.msra.mxu0 0
      %1591 = vmatprep.subr.bf16.mxu0 0
      %1592 = vmatpush2.bf16.msra.mxu0 0
      %1593 = vmatprep.subr.bf16.mxu0 0
      %1594 = vmatpush2.bf16.msra.mxu0 0
      %1595 = vmatprep.subr.bf16.mxu0 0
      %1596 = vmatpush2.bf16.msra.mxu0 0
      %1597 = vmatprep.mubr.bf16.mxu0 0
      %1598 = vmatmul.mubr.bf16.gmra.mxu0 %v1557
      %v1599 = vpop.f32.mrf.mxu0
      %v1600 = vadd.f32 %v785, %v1599
      %v1601 = vpop.f32.mrf.mxu0
      %v1602 = vpop.f32.mrf.mxu0
      %v1603 = vadd.f32 %v785, %v1602
      %v1604 = vpop.f32.mrf.mxu0
      %1605 = vmatprep.mubr.bf16.mxu0 0
      %1606 = vmatmul.mubr.bf16.gmra.mxu0 %v1558
      %v1607 = vpop.f32.mrf.mxu0
      %v1608 = vadd.f32 %v785, %v1607
      %v1609 = vpop.f32.mrf.mxu0
      %v1610 = vpop.f32.mrf.mxu0
      %v1611 = vadd.f32 %v785, %v1610
      %v1612 = vpop.f32.mrf.mxu0
      %1613 = vmatprep.mubr.bf16.mxu0 0
      %1614 = vmatmul.mubr.bf16.gmra.mxu0 %v1559
      %v1615 = vpop.f32.mrf.mxu0
      %v1616 = vadd.f32 %v785, %v1615
      %v1617 = vpop.f32.mrf.mxu0
      %v1618 = vpop.f32.mrf.mxu0
      %v1619 = vadd.f32 %v785, %v1618
      %v1620 = vpop.f32.mrf.mxu0
      %1621 = vmatprep.mubr.bf16.mxu0 0
      %1622 = vmatmul.mubr.bf16.gmra.mxu0 %v1560
      %v1623 = vpop.f32.mrf.mxu0
      %v1624 = vadd.f32 %v785, %v1623
      %v1625 = vpop.f32.mrf.mxu0
      %v1626 = vpop.f32.mrf.mxu0
      %v1627 = vadd.f32 %v785, %v1626
      %v1628 = vpop.f32.mrf.mxu0
      %1629 = vmatprep.mubr.bf16.mxu0 0
      %1630 = vmatmul.mubr.bf16.gmra.mxu0 %v1561
      %v1631 = vpop.f32.mrf.mxu0
      %v1632 = vadd.f32 %v785, %v1631
      %v1633 = vpop.f32.mrf.mxu0
      %v1634 = vpop.f32.mrf.mxu0
      %v1635 = vadd.f32 %v785, %v1634
      %v1636 = vpop.f32.mrf.mxu0
      %1637 = vmatprep.mubr.bf16.mxu0 0
      %1638 = vmatmul.mubr.bf16.gmra.mxu0 %v1562
      %v1639 = vpop.f32.mrf.mxu0
      %v1640 = vadd.f32 %v785, %v1639
      %v1641 = vpop.f32.mrf.mxu0
      %v1642 = vpop.f32.mrf.mxu0
      %v1643 = vadd.f32 %v785, %v1642
      %v1644 = vpop.f32.mrf.mxu0
      %1645 = vmatprep.mubr.bf16.mxu0 0
      %1646 = vmatmul.mubr.bf16.gmra.mxu0 %v1563
      %v1647 = vpop.f32.mrf.mxu0
      %v1648 = vadd.f32 %v785, %v1647
      %v1649 = vpop.f32.mrf.mxu0
      %v1650 = vpop.f32.mrf.mxu0
      %v1651 = vadd.f32 %v785, %v1650
      %v1652 = vpop.f32.mrf.mxu0
      %1653 = vmatprep.mubr.bf16.mxu0 0
      %1654 = vmatmul.mubr.bf16.gmra.mxu0 %v1564
      %v1655 = vpop.f32.mrf.mxu0
      %v1656 = vadd.f32 %v785, %v1655
      %v1657 = vpop.f32.mrf.mxu0
      %v1658 = vpop.f32.mrf.mxu0
      %v1659 = vadd.f32 %v785, %v1658
      %v1660 = vpop.f32.mrf.mxu0
      %1661 = vdwg.mxu0
      %v1662 = vmax.f32 %v1600, 0.0
      %v1663 = vmax.f32 %v1603, 0.0
      %v1664 = vmax.f32 %v1608, 0.0
      %v1665 = vmax.f32 %v1611, 0.0
      %v1666 = vmax.f32 %v1616, 0.0
      %v1667 = vmax.f32 %v1619, 0.0
      %v1668 = vmax.f32 %v1624, 0.0
      %v1669 = vmax.f32 %v1627, 0.0
      %v1670 = vmax.f32 %v1632, 0.0
      %v1671 = vmax.f32 %v1635, 0.0
      %v1672 = vmax.f32 %v1640, 0.0
      %v1673 = vmax.f32 %v1643, 0.0
      %v1674 = vmax.f32 %v1648, 0.0
      %v1675 = vmax.f32 %v1651, 0.0
      %v1676 = vmax.f32 %v1656, 0.0
      %v1677 = vmax.f32 %v1659, 0.0
      %v1678 = vpack.c.bf16 %v1663, %v1662
      %v1679 = vpack.c.bf16 %v1665, %v1664
      %v1680 = vpack.c.bf16 %v1667, %v1666
      %v1681 = vpack.c.bf16 %v1669, %v1668
      %v1682 = vpack.c.bf16 %v1671, %v1670
      %v1683 = vpack.c.bf16 %v1673, %v1672
      %v1684 = vpack.c.bf16 %v1675, %v1674
      %v1685 = vpack.c.bf16 %v1677, %v1676
      %1686 = vmatprep.subr.bf16.mxu0 0
      %1687 = vmatpush1.bf16.msra.mxu0 %v1001
      %1688 = vmatprep.subr.bf16.mxu0 0
      %1689 = vmatpush1.bf16.msra.mxu0 %v1000
      %1690 = vmatprep.subr.bf16.mxu0 0
      %1691 = vmatpush1.bf16.msra.mxu0 %v999
      %1692 = vmatprep.subr.bf16.mxu0 0
      %1693 = vmatpush1.bf16.msra.mxu0 %v998
      %1694 = vmatprep.subr.bf16.mxu0 0
      %1695 = vmatpush1.bf16.msra.mxu0 %v997
      %1696 = vmatprep.subr.bf16.mxu0 0
      %1697 = vmatpush1.bf16.msra.mxu0 %v996
      %1698 = vmatprep.subr.bf16.mxu0 0
      %1699 = vmatpush1.bf16.msra.mxu0 %v995
      %1700 = vmatprep.subr.bf16.mxu0 0
      %1701 = vmatpush1.bf16.msra.mxu0 %v994
      %1702 = vmatprep.subr.bf16.mxu0 0
      %1703 = vmatpush2.bf16.msra.mxu0 0
      %1704 = vmatprep.subr.bf16.mxu0 0
      %1705 = vmatpush2.bf16.msra.mxu0 0
      %1706 = vmatprep.subr.bf16.mxu0 0
      %1707 = vmatpush2.bf16.msra.mxu0 0
      %1708 = vmatprep.subr.bf16.mxu0 0
      %1709 = vmatpush2.bf16.msra.mxu0 0
      %1710 = vmatprep.subr.bf16.mxu0 0
      %1711 = vmatpush2.bf16.msra.mxu0 0
      %1712 = vmatprep.subr.bf16.mxu0 0
      %1713 = vmatpush2.bf16.msra.mxu0 0
      %1714 = vmatprep.subr.bf16.mxu0 0
      %1715 = vmatpush2.bf16.msra.mxu0 0
      %1716 = vmatprep.subr.bf16.mxu0 0
      %1717 = vmatpush2.bf16.msra.mxu0 0
      %1718 = vmatprep.mubr.bf16.mxu0 0
      %1719 = vmatmul.mubr.bf16.gmra.mxu0 %v1678
      %v1720 = vpop.f32.mrf.mxu0
      %v1721 = vadd.f32 %v960, %v1720
      %v1722 = vpop.f32.mrf.mxu0
      %v1723 = vpop.f32.mrf.mxu0
      %v1724 = vadd.f32 %v960, %v1723
      %v1725 = vpop.f32.mrf.mxu0
      %1726 = vmatprep.mubr.bf16.mxu0 0
      %1727 = vmatmul.mubr.bf16.gmra.mxu0 %v1679
      %v1728 = vpop.f32.mrf.mxu0
      %v1729 = vadd.f32 %v960, %v1728
      %v1730 = vpop.f32.mrf.mxu0
      %v1731 = vpop.f32.mrf.mxu0
      %v1732 = vadd.f32 %v960, %v1731
      %v1733 = vpop.f32.mrf.mxu0
      %1734 = vmatprep.mubr.bf16.mxu0 0
      %1735 = vmatmul.mubr.bf16.gmra.mxu0 %v1680
      %v1736 = vpop.f32.mrf.mxu0
      %v1737 = vadd.f32 %v960, %v1736
      %v1738 = vpop.f32.mrf.mxu0
      %v1739 = vpop.f32.mrf.mxu0
      %v1740 = vadd.f32 %v960, %v1739
      %v1741 = vpop.f32.mrf.mxu0
      %1742 = vmatprep.mubr.bf16.mxu0 0
      %1743 = vmatmul.mubr.bf16.gmra.mxu0 %v1681
      %v1744 = vpop.f32.mrf.mxu0
      %v1745 = vadd.f32 %v960, %v1744
      %v1746 = vpop.f32.mrf.mxu0
      %v1747 = vpop.f32.mrf.mxu0
      %v1748 = vadd.f32 %v960, %v1747
      %v1749 = vpop.f32.mrf.mxu0
      %1750 = vmatprep.mubr.bf16.mxu0 0
      %1751 = vmatmul.mubr.bf16.gmra.mxu0 %v1682
      %v1752 = vpop.f32.mrf.mxu0
      %v1753 = vadd.f32 %v960, %v1752
      %v1754 = vpop.f32.mrf.mxu0
      %v1755 = vpop.f32.mrf.mxu0
      %v1756 = vadd.f32 %v960, %v1755
      %v1757 = vpop.f32.mrf.mxu0
      %1758 = vmatprep.mubr.bf16.mxu0 0
      %1759 = vmatmul.mubr.bf16.gmra.mxu0 %v1683
      %v1760 = vpop.f32.mrf.mxu0
      %v1761 = vadd.f32 %v960, %v1760
      %v1762 = vpop.f32.mrf.mxu0
      %v1763 = vpop.f32.mrf.mxu0
      %v1764 = vadd.f32 %v960, %v1763
      %v1765 = vpop.f32.mrf.mxu0
      %1766 = vmatprep.mubr.bf16.mxu0 0
      %1767 = vmatmul.mubr.bf16.gmra.mxu0 %v1684
      %v1768 = vpop.f32.mrf.mxu0
      %v1769 = vadd.f32 %v960, %v1768
      %v1770 = vpop.f32.mrf.mxu0
      %v1771 = vpop.f32.mrf.mxu0
      %v1772 = vadd.f32 %v960, %v1771
      %v1773 = vpop.f32.mrf.mxu0
      %1774 = vmatprep.mubr.bf16.mxu0 0
      %1775 = vmatmul.mubr.bf16.gmra.mxu0 %v1685
      %v1776 = vpop.f32.mrf.mxu0
      %v1777 = vadd.f32 %v960, %v1776
      %v1778 = vpop.f32.mrf.mxu0
      %v1779 = vpop.f32.mrf.mxu0
      %v1780 = vadd.f32 %v960, %v1779
      %v1781 = vpop.f32.mrf.mxu0
      %1782 = vdwg.mxu0
      %s1783 = scalar_lea.vmem %s280, 128
      %1784 = vst.msk [vmem:[%s1783] sm:$0xff] %vm1107, %v1721
      %1785 = vst.msk [vmem:[%s1783 + $0x8] sm:$0xff] %vm1107, %v1724
      %1786 = vst.msk [vmem:[%s1783 + $0x10] sm:$0xff] %vm1107, %v1729
      %1787 = vst.msk [vmem:[%s1783 + $0x18] sm:$0xff] %vm1107, %v1732
      %1788 = vst.msk [vmem:[%s1783 + $0x20] sm:$0xff] %vm1107, %v1737
      %1789 = vst.msk [vmem:[%s1783 + $0x28] sm:$0xff] %vm1107, %v1740
      %1790 = vst.msk [vmem:[%s1783 + $0x30] sm:$0xff] %vm1107, %v1745
      %1791 = vst.msk [vmem:[%s1783 + $0x38] sm:$0xff] %vm1107, %v1748
      %1792 = vst.msk [vmem:[%s1783 + $0x40] sm:$0xff] %vm1107, %v1753
      %1793 = vst.msk [vmem:[%s1783 + $0x48] sm:$0xff] %vm1107, %v1756
      %1794 = vst.msk [vmem:[%s1783 + $0x50] sm:$0xff] %vm1107, %v1761
      %1795 = vst.msk [vmem:[%s1783 + $0x58] sm:$0xff] %vm1107, %v1764
      %1796 = vst.msk [vmem:[%s1783 + $0x60] sm:$0xff] %vm1107, %v1769
      %1797 = vst.msk [vmem:[%s1783 + $0x68] sm:$0xff] %vm1107, %v1772
      %1798 = vst.msk [vmem:[%s1783 + $0x70] sm:$0xff] %vm1107, %v1777
      %1799 = vst.msk [vmem:[%s1783 + $0x78] sm:$0xff] %vm1107, %v1780
      %s1800 = smul.u32 32, %s18
      %p1801 = scmp.lt.s32.totalorder %s1800, 63
      %s1802 = scalar_select %p1801, %s1800, 63
      %s1803 = smul.addr %s1802, 8
      %s1804 = scalar_lea.vmem %s7, %s1803
      // Predicated region
      $region49: #{tpu_custom_call.1} parent=47 // pred_check
        %p1805 = pneg %p188
      $region50: #{tpu_custom_call.1} parent=47 // pred_check_branch
        %1807 = sbr.rel (%p1805) target = $region52
      $region51: #{tpu_custom_call.1} parent=47 // pred_region
        %s1808 = smul.u32 32, %s18
      $region52: #{tpu_custom_call.1} parent=47 // pred_fallthru
        _
    $region48: #{tpu_custom_call.1} parent=5 // pred_fallthru
      _
    %p1809 = scmp.le.s32.totalorder 2, %s13
    // Predicated region
    $region53: #{tpu_custom_call.1} parent=5 // pred_check
      %p1810 = pneg %p1809
    $region54: #{tpu_custom_call.1} parent=5 // pred_check_branch
      %1812 = sbr.rel (%p1810) target = $region56
    $region55: #{tpu_custom_call.1} parent=5 // pred_region
      %s1813 = ssub.s32 %s13, 2
      // Predicated region
      $region57: #{tpu_custom_call.1} parent=55 // pred_check
        %p1814 = pneg %p194
      $region58: #{tpu_custom_call.1} parent=55 // pred_check_branch
        %1816 = sbr.rel (%p1814) target = $region60
      $region59: #{tpu_custom_call.1} parent=55 // pred_region
        %s1817 = smul.u32 32, %s19
        %p1818 = scmp.lt.s32.totalorder %s1817, 63
        %s1819 = scalar_select %p1818, %s1817, 63
        %s1820 = smul.addr %s1819, 8
        %s1821 = scalar_lea.vmem %s7, %s1820
      $region60: #{tpu_custom_call.1} parent=55 // pred_fallthru
        _
    $region56: #{tpu_custom_call.1} parent=5 // pred_fallthru
      _
  $region6: #{tpu_custom_call.1} parent=0 // loop_footer
    %s17 = sadd.s32 1, %s13
  $region7: #{tpu_custom_call.1} parent=0 // loop_footer_branch
    %12 = sbr.rel target = $region3
  $region8: #{tpu_custom_call.1} parent=0 // loop_exit
    _

</llo_original>
